<compile_context>
chip_gen: v7x
topology: tpu7x:2x2x1
jax: 0.10.0
libtpu: 0.0.40
codegen_flags: <defaults>
</compile_context>

<pallas_src>
import jax
import jax.numpy as jnp
from jax.experimental import pallas as pl
from jax.experimental.pallas import tpu as pltpu

NEG_INF = -1e30


def _sigmoid(x):
    return 1.0 / (1.0 + jnp.exp(-x))


# ---------------------------------------------------------------------------
# BiLSTM kernel (RNNEncoder: nn.LSTM(2H, H, num_layers=1, bidirectional=True))
# ---------------------------------------------------------------------------
def _bilstm_kernel(lens_ref,                               # SMEM (B,) int32
                   mod_ref,                                # (L, 2H)
                   wih_f_ref, whh_f_ref, b_f_ref,          # (2H,4H) (H,4H) (1,4H)
                   wih_b_ref, whh_b_ref, b_b_ref,
                   out_ref,                                # (L, 2H)
                   xg_ref, h_ref, c_ref):                  # scratch
    b = pl.program_id(0)
    length = lens_ref[b]
    seq_len = mod_ref.shape[0]
    hidden = whh_f_ref.shape[0]

    x = mod_ref[...].astype(jnp.float32)                   # (L, 2H)

    def run_direction(wih_ref, whh_ref, b_ref, reverse, col0):
        # Input-to-gate projection for all timesteps in a single MXU matmul.
        xg_ref[...] = (jnp.dot(x, wih_ref[...].astype(jnp.float32),
                               preferred_element_type=jnp.float32)
                       + b_ref[...].astype(jnp.float32))   # (L, 4H)
        h_ref[...] = jnp.zeros_like(h_ref)
        c_ref[...] = jnp.zeros_like(c_ref)
        whh = whh_ref[...].astype(jnp.float32)              # (H, 4H)

        @pl.loop(0, seq_len)
        def _(s):
            t = (seq_len - 1 - s) if reverse else s
            gates = (xg_ref[pl.ds(t, 1), :]
                     + jnp.dot(h_ref[...], whh,
                               preferred_element_type=jnp.float32))   # (1, 4H)
            i_g = _sigmoid(gates[:, 0 * hidden:1 * hidden])
            f_g = _sigmoid(gates[:, 1 * hidden:2 * hidden])
            g_g = jnp.tanh(gates[:, 2 * hidden:3 * hidden])
            o_g = _sigmoid(gates[:, 3 * hidden:4 * hidden])
            c_new = f_g * c_ref[...] + i_g * g_g
            h_new = o_g * jnp.tanh(c_new)
            # Packed-sequence semantics (pack_padded_sequence/pad_packed_sequence):
            # past the true length the state is frozen and the output is zero.
            vf = (t < length).astype(jnp.float32)
            h_sel = vf * h_new + (1.0 - vf) * h_ref[...]
            c_sel = vf * c_new + (1.0 - vf) * c_ref[...]
            h_ref[...] = h_sel
            c_ref[...] = c_sel
            out_ref[pl.ds(t, 1), col0:col0 + hidden] = (vf * h_sel).astype(out_ref.dtype)

    run_direction(wih_f_ref, whh_f_ref, b_f_ref, reverse=False, col0=0)
    run_direction(wih_b_ref, whh_b_ref, b_b_ref, reverse=True, col0=hidden)


def _bilstm_pallas(mod, lengths, wih_f, whh_f, b_f, wih_b, whh_b, b_b):
    B, L, d_mod = mod.shape
    H = whh_f.shape[0]

    def x_map(b, lens):
        return (b, 0, 0)

    def w_map(b, lens):
        return (0, 0)

    return pl.pallas_call(
        _bilstm_kernel,
        out_shape=jax.ShapeDtypeStruct((B, L, 2 * H), mod.dtype),
        grid_spec=pltpu.PrefetchScalarGridSpec(
            num_scalar_prefetch=1,                       # lengths -> SMEM
            grid=(B,),
            in_specs=[
                pl.BlockSpec((None, L, d_mod), x_map),
                pl.BlockSpec((d_mod, 4 * H), w_map),
                pl.BlockSpec((H, 4 * H), w_map),
                pl.BlockSpec((1, 4 * H), w_map),
                pl.BlockSpec((d_mod, 4 * H), w_map),
                pl.BlockSpec((H, 4 * H), w_map),
                pl.BlockSpec((1, 4 * H), w_map),
            ],
            out_specs=pl.BlockSpec((None, L, 2 * H), x_map),
            scratch_shapes=[
                pltpu.VMEM((L, 4 * H), jnp.float32),     # precomputed x-gates
                pltpu.VMEM((1, H), jnp.float32),         # h
                pltpu.VMEM((1, H), jnp.float32),         # c
            ],
        ),
        compiler_params=pltpu.CompilerParams(
            dimension_semantics=("parallel",)),          # batch rows independent
    )(lengths, mod, wih_f, whh_f, b_f, wih_b, whh_b, b_b)


# ---------------------------------------------------------------------------
# Fused start/end pointer kernel: both linear heads + both masked log-softmaxes
# ---------------------------------------------------------------------------
def _pointer_kernel(att_ref, mod_ref, mod2_ref, mask_ref,
                    w_att_ref, w_mod_ref, bias_ref, out_ref):
    block_b = att_ref.shape[0]

    w_att = w_att_ref[...].astype(jnp.float32)           # (8H, 2) packed heads
    w_mod = w_mod_ref[...].astype(jnp.float32)           # (2H, 2) packed heads
    b1 = bias_ref[0]                                     # SMEM scalars
    b2 = bias_ref[1]

    for j in range(block_b):                             # static unroll over folded batch rows
        att = att_ref[j].astype(jnp.float32)             # (L, 8H)
        mod = mod_ref[j].astype(jnp.float32)             # (L, 2H)
        mod2 = mod2_ref[j].astype(jnp.float32)           # (L, 2H)
        valid = mask_ref[j] != 0                         # (L, 1)

        # Both att projections share one MXU dot (att read once from vregs).
        l_att = jnp.dot(att, w_att, preferred_element_type=jnp.float32)       # (L, 2)
        l1 = l_att[:, 0:1] + jnp.dot(mod, w_mod[:, 0:1],
                                     preferred_element_type=jnp.float32) + b1  # (L, 1)
        l2 = l_att[:, 1:2] + jnp.dot(mod2, w_mod[:, 1:2],
                                     preferred_element_type=jnp.float32) + b2  # (L, 1)

        def masked_log_softmax(logits):                  # softmax over L (axis 0)
            masked = jnp.where(valid, logits, NEG_INF)
            mx = jnp.max(masked, axis=0, keepdims=True)
            shifted = masked - mx
            lse = jnp.log(jnp.sum(jnp.exp(shifted), axis=0, keepdims=True))
            return shifted - lse

        out_ref[j, :, 0:1] = masked_log_softmax(l1).astype(out_ref.dtype)
        out_ref[j, :, 1:2] = masked_log_softmax(l2).astype(out_ref.dtype)


def _pick_block_batch(B, per_batch_bytes, vmem_budget_bytes=24 * 1024 * 1024):
    """Largest divisor of B whose double-buffered working set fits the budget,
    preferring >= 2 grid steps so the v7x megacore can split the batch axis."""
    max_bt = max(1, vmem_budget_bytes // max(1, 2 * per_batch_bytes))
    divisors = [d for d in range(1, B + 1) if B % d == 0 and d <= max_bt]
    if not divisors:
        return 1
    multi = [d for d in divisors if B // d >= 2]
    return max(multi) if multi else max(divisors)


def _pointer_pallas(att, mod, mod2, mask3, w_att, w_mod, bias):
    B, L, d_att = att.shape
    d_mod = mod.shape[-1]

    per_batch_bytes = L * (d_att * att.dtype.itemsize
                           + d_mod * (mod.dtype.itemsize + mod2.dtype.itemsize)
                           + mask3.dtype.itemsize
                           + 2 * 4)                       # output row
    block_b = _pick_block_batch(B, per_batch_bytes)
    grid = (B // block_b,)

    def im(i):
        return (i, 0, 0)

    return pl.pallas_call(
        _pointer_kernel,
        out_shape=jax.ShapeDtypeStruct((B, L, 2), jnp.float32),
        grid_spec=pltpu.PrefetchScalarGridSpec(
            num_scalar_prefetch=0,
            grid=grid,
            in_specs=[
                pl.BlockSpec((block_b, L, d_att), im),
                pl.BlockSpec((block_b, L, d_mod), im),
                pl.BlockSpec((block_b, L, d_mod), im),
                pl.BlockSpec((block_b, L, 1), im),
                pl.BlockSpec((d_att, 2), lambda i: (0, 0)),
                pl.BlockSpec((d_mod, 2), lambda i: (0, 0)),
                pl.BlockSpec(memory_space=pltpu.MemorySpace.SMEM),   # packed biases
            ],
            out_specs=pl.BlockSpec((block_b, L, 2), im),
        ),
        compiler_params=pltpu.CompilerParams(
            dimension_semantics=("parallel",),
            vmem_limit_bytes=32 * 1024 * 1024),
    )(att, mod, mod2, mask3, w_att, w_mod, bias)


# ---------------------------------------------------------------------------
# Wrapper: full BiDAFOutput forward
# ---------------------------------------------------------------------------
def bidaf_output(att, mod, mask, params):
    """att: (B, L, 8H); mod: (B, L, 2H); mask: (B, L) with 1 = valid token.
    Returns (log_p1, log_p2), each (B, L)."""
    B, L, d_att = att.shape
    d_mod = mod.shape[-1]
    H = d_mod // 2

    lengths = jnp.sum(mask, axis=-1).astype(jnp.int32)    # == mask.sum(-1) in the module

    # --- BiLSTM over mod (packed-sequence semantics via lengths) ---
    wih_f = params["w_ih_f"].T.astype(jnp.float32)        # (2H, 4H)
    whh_f = params["w_hh_f"].T.astype(jnp.float32)        # (H, 4H)
    b_f = (params["b_ih_f"] + params["b_hh_f"]).reshape(1, 4 * H).astype(jnp.float32)
    wih_b = params["w_ih_b"].T.astype(jnp.float32)
    whh_b = params["w_hh_b"].T.astype(jnp.float32)
    b_b = (params["b_ih_b"] + params["b_hh_b"]).reshape(1, 4 * H).astype(jnp.float32)

    mod_2 = _bilstm_pallas(mod, lengths, wih_f, whh_f, b_f, wih_b, whh_b, b_b)

    # --- fused start/end pointer head (weights packed, biases -> SMEM) ---
    w_att = jnp.concatenate([params["att_w1"].reshape(d_att, 1),
                             params["att_w2"].reshape(d_att, 1)], axis=1).astype(jnp.float32)
    w_mod = jnp.concatenate([params["mod_w1"].reshape(d_mod, 1),
                             params["mod_w2"].reshape(d_mod, 1)], axis=1).astype(jnp.float32)
    bias = jnp.stack([params["att_b1"][0] + params["mod_b1"][0],
                      params["att_b2"][0] + params["mod_b2"][0]]).astype(jnp.float32)  # (2,)

    mask3 = mask.astype(jnp.float32).reshape(B, L, 1)

    out = _pointer_pallas(att, mod, mod_2, mask3, w_att, w_mod, bias)
    return out[..., 0], out[..., 1]


# ---------------------------------------------------------------------------
# Pure-JAX reference of the PyTorch forward (eval mode)
# ---------------------------------------------------------------------------
def _lstm_dir_ref(x, lengths, w_ih_t, w_hh_t, b, reverse):
    B, L, _ = x.shape
    H = w_hh_t.shape[0]
    xg = jnp.einsum("bld,dg->blg", x, w_ih_t) + b          # (B, L, 4H)
    order = jnp.arange(L - 1, -1, -1) if reverse else jnp.arange(L)

    def step(carry, t):
        h, c = carry
        g = xg[:, t, :] + h @ w_hh_t                       # (B, 4H)
        i = _sigmoid(g[:, 0:H])
        f = _sigmoid(g[:, H:2 * H])
        gg = jnp.tanh(g[:, 2 * H:3 * H])
        o = _sigmoid(g[:, 3 * H:4 * H])
        c_new = f * c + i * gg
        h_new = o * jnp.tanh(c_new)
        valid = (t < lengths)[:, None]
        h = jnp.where(valid, h_new, h)
        c = jnp.where(valid, c_new, c)
        return (h, c), jnp.where(valid, h, 0.0)

    init = (jnp.zeros((B, H), jnp.float32), jnp.zeros((B, H), jnp.float32))
    _, outs = jax.lax.scan(step, init, order)              # (L, B, H) in scan order
    outs = jnp.transpose(outs, (1, 0, 2))
    if reverse:
        outs = outs[:, ::-1, :]
    return outs


def bidaf_output_ref(att, mod, mask, params):
    p = params
    H = mod.shape[-1] // 2
    lengths = jnp.sum(mask, axis=-1).astype(jnp.int32)
    x = mod.astype(jnp.float32)
    fwd = _lstm_dir_ref(x, lengths, p["w_ih_f"].T, p["w_hh_f"].T,
                        (p["b_ih_f"] + p["b_hh_f"])[None, :], reverse=False)
    bwd = _lstm_dir_ref(x, lengths, p["w_ih_b"].T, p["w_hh_b"].T,
                        (p["b_ih_b"] + p["b_hh_b"])[None, :], reverse=True)
    mod_2 = jnp.concatenate([fwd, bwd], axis=-1)           # (B, L, 2H)

    logits1 = (jnp.einsum("bld,d->bl", att, p["att_w1"][0]) + p["att_b1"][0]
               + jnp.einsum("bld,d->bl", mod, p["mod_w1"][0]) + p["mod_b1"][0])
    logits2 = (jnp.einsum("bld,d->bl", att, p["att_w2"][0]) + p["att_b2"][0]
               + jnp.einsum("bld,d->bl", mod_2, p["mod_w2"][0]) + p["mod_b2"][0])

    def mls(lg):
        masked = jnp.where(mask != 0, lg, NEG_INF)
        return jax.nn.log_softmax(masked, axis=-1)

    return mls(logits1), mls(logits2)


if __name__ == "__main__":
    B, L, H = 2, 24, 16                                    # batch, seq_len, hidden_size
    keys = jax.random.split(jax.random.PRNGKey(0), 18)

    def uinit(k, shape, fan):
        bound = 1.0 / (float(fan) ** 0.5)
        return jax.random.uniform(k, shape, jnp.float32, -bound, bound)

    att = jax.random.normal(keys[0], (B, L, 8 * H), jnp.float32)
    mod = jax.random.normal(keys[1], (B, L, 2 * H), jnp.float32)

    params = {
        "att_w1": uinit(keys[2], (1, 8 * H), 8 * H), "att_b1": uinit(keys[3], (1,), 8 * H),
        "mod_w1": uinit(keys[4], (1, 2 * H), 2 * H), "mod_b1": uinit(keys[5], (1,), 2 * H),
        "att_w2": uinit(keys[6], (1, 8 * H), 8 * H), "att_b2": uinit(keys[7], (1,), 8 * H),
        "mod_w2": uinit(keys[8], (1, 2 * H), 2 * H), "mod_b2": uinit(keys[9], (1,), 2 * H),
        "w_ih_f": uinit(keys[10], (4 * H, 2 * H), H), "w_hh_f": uinit(keys[11], (4 * H, H), H),
        "b_ih_f": uinit(keys[12], (4 * H,), H), "b_hh_f": uinit(keys[13], (4 * H,), H),
        "w_ih_b": uinit(keys[14], (4 * H, 2 * H), H), "w_hh_b": uinit(keys[15], (4 * H, H), H),
        "b_ih_b": uinit(keys[16], (4 * H,), H), "b_hh_b": uinit(keys[17], (4 * H,), H),
    }

    # padding mask: 1 for valid tokens, 0 for (trailing) padding
    lengths = jnp.array([L, L - 7], dtype=jnp.int32)
    mask = (jnp.arange(L)[None, :] < lengths[:, None]).astype(jnp.float32)

    fwd_fn = jax.jit(bidaf_output)
    log_p1, log_p2 = fwd_fn(att, mod, mask, params)
    jax.block_until_ready((log_p1, log_p2))

    r1, r2 = bidaf_output_ref(att, mod, mask, params)
    assert log_p1.shape == (B, L) and log_p2.shape == (B, L)
    assert bool(jnp.allclose(log_p1, r1, rtol=1e-3, atol=2e-3)), "log_p1 mismatch"
    assert bool(jnp.allclose(log_p2, r2, rtol=1e-3, atol=2e-3)), "log_p2 mismatch"

    print("KERNEL_OK")
</pallas_src>

<mosaic_0001>
module attributes {stable_mosaic.version = 11 : i64} {
  func.func @_pointer_kernel(%arg0: i32, %arg1: memref<1x24x128xf32, #tpu.memory_space<vmem>>, %arg2: memref<1x24x32xf32, #tpu.memory_space<vmem>>, %arg3: memref<1x24x32xf32, #tpu.memory_space<vmem>>, %arg4: memref<1x24x1xf32, #tpu.memory_space<vmem>>, %arg5: memref<128x2xf32, #tpu.memory_space<vmem>>, %arg6: memref<32x2xf32, #tpu.memory_space<vmem>>, %arg7: memref<2xf32, #tpu.memory_space<smem>>, %arg8: memref<1x24x2xf32, #tpu.memory_space<vmem>>) attributes {dimension_semantics = [#tpu.dimension_semantics<parallel>], iteration_bounds = array<i64: 2>, scalar_prefetch = 0 : i64, scratch_operands = 0 : i64, tpu.core_type = #tpu.core_type<tc>, window_params = [{transform_indices = @transform_0, window_bounds = array<i64: 1, 24, 128>}, {transform_indices = @transform_1, window_bounds = array<i64: 1, 24, 32>}, {transform_indices = @transform_2, window_bounds = array<i64: 1, 24, 32>}, {transform_indices = @transform_3, window_bounds = array<i64: 1, 24, 1>}, {pipeline_mode = #tpu.pipeline_mode<synchronous>, transform_indices = @transform_4, window_bounds = array<i64: 128, 2>}, {pipeline_mode = #tpu.pipeline_mode<synchronous>, transform_indices = @transform_5, window_bounds = array<i64: 32, 2>}, {transform_indices = @transform_6, window_bounds = array<i64: 2>}, {transform_indices = @transform_7, window_bounds = array<i64: 1, 24, 2>}]} {
    %c0 = arith.constant 0 : index
    %c0_0 = arith.constant 0 : index
    %0 = vector.load %arg5[%c0, %c0_0] : memref<128x2xf32, #tpu.memory_space<vmem>>, vector<128x2xf32>
    %c0_1 = arith.constant 0 : index
    %c0_2 = arith.constant 0 : index
    %1 = vector.load %arg6[%c0_1, %c0_2] : memref<32x2xf32, #tpu.memory_space<vmem>>, vector<32x2xf32>
    %c0_3 = arith.constant 0 : index
    %2 = memref.load %arg7[%c0_3] : memref<2xf32, #tpu.memory_space<smem>>
    %c1 = arith.constant 1 : index
    %3 = memref.load %arg7[%c1] : memref<2xf32, #tpu.memory_space<smem>>
    %c0_4 = arith.constant 0 : index
    %c0_5 = arith.constant 0 : index
    %c0_6 = arith.constant 0 : index
    %4 = vector.load %arg1[%c0_4, %c0_5, %c0_6] : memref<1x24x128xf32, #tpu.memory_space<vmem>>, vector<1x24x128xf32>
    %5 = vector.shape_cast %4 : vector<1x24x128xf32> to vector<24x128xf32>
    %c0_7 = arith.constant 0 : index
    %c0_8 = arith.constant 0 : index
    %c0_9 = arith.constant 0 : index
    %6 = vector.load %arg2[%c0_7, %c0_8, %c0_9] : memref<1x24x32xf32, #tpu.memory_space<vmem>>, vector<1x24x32xf32>
    %7 = vector.shape_cast %6 : vector<1x24x32xf32> to vector<24x32xf32>
    %c0_10 = arith.constant 0 : index
    %c0_11 = arith.constant 0 : index
    %c0_12 = arith.constant 0 : index
    %8 = vector.load %arg3[%c0_10, %c0_11, %c0_12] : memref<1x24x32xf32, #tpu.memory_space<vmem>>, vector<1x24x32xf32>
    %9 = vector.shape_cast %8 : vector<1x24x32xf32> to vector<24x32xf32>
    %c0_13 = arith.constant 0 : index
    %c0_14 = arith.constant 0 : index
    %c0_15 = arith.constant 0 : index
    %10 = vector.load %arg4[%c0_13, %c0_14, %c0_15] : memref<1x24x1xf32, #tpu.memory_space<vmem>>, vector<1x24x1xf32>
    %11 = vector.shape_cast %10 : vector<1x24x1xf32> to vector<24x1xf32>
    %cst = arith.constant 0.000000e+00 : f32
    %12 = vector.broadcast %cst : f32 to vector<24x1xf32>
    %13 = arith.cmpf one, %11, %12 : vector<24x1xf32>
    %cst_16 = arith.constant dense<0.000000e+00> : vector<24x2xf32>
    %14 = tpu.matmul %5, %0, %cst_16 {dimension_numbers = #tpu.dot_dimension_numbers<[1], [0], [0], [1], [0, 0, 1, 1], [], []>} : vector<24x128xf32>, vector<128x2xf32>, vector<24x2xf32> -> vector<24x2xf32>
    %15 = vector.extract_strided_slice %14 {offsets = [0, 0], sizes = [24, 1], strides = [1, 1]} : vector<24x2xf32> to vector<24x1xf32>
    %16 = vector.extract_strided_slice %1 {offsets = [0, 0], sizes = [32, 1], strides = [1, 1]} : vector<32x2xf32> to vector<32x1xf32>
    %cst_17 = arith.constant dense<0.000000e+00> : vector<24x1xf32>
    %17 = tpu.matmul %7, %16, %cst_17 {dimension_numbers = #tpu.dot_dimension_numbers<[1], [0], [0], [1], [0, 0, 1, 1], [], []>} : vector<24x32xf32>, vector<32x1xf32>, vector<24x1xf32> -> vector<24x1xf32>
    %18 = arith.addf %15, %17 : vector<24x1xf32>
    %19 = vector.broadcast %2 : f32 to vector<24x1xf32>
    %20 = arith.addf %18, %19 : vector<24x1xf32>
    %21 = vector.extract_strided_slice %14 {offsets = [0, 1], sizes = [24, 1], strides = [1, 1]} : vector<24x2xf32> to vector<24x1xf32>
    %22 = vector.extract_strided_slice %1 {offsets = [0, 1], sizes = [32, 1], strides = [1, 1]} : vector<32x2xf32> to vector<32x1xf32>
    %cst_18 = arith.constant dense<0.000000e+00> : vector<24x1xf32>
    %23 = tpu.matmul %9, %22, %cst_18 {dimension_numbers = #tpu.dot_dimension_numbers<[1], [0], [0], [1], [0, 0, 1, 1], [], []>} : vector<24x32xf32>, vector<32x1xf32>, vector<24x1xf32> -> vector<24x1xf32>
    %24 = arith.addf %21, %23 : vector<24x1xf32>
    %25 = vector.broadcast %3 : f32 to vector<24x1xf32>
    %26 = arith.addf %24, %25 : vector<24x1xf32>
    %cst_19 = arith.constant -1.000000e+30 : f32
    %27 = vector.broadcast %cst_19 : f32 to vector<24x1xf32>
    %28 = arith.select %13, %20, %27 : vector<24x1xi1>, vector<24x1xf32>
    %cst_20 = arith.constant dense<0xFF800000> : vector<1xf32>
    %29 = vector.multi_reduction <maximumf>, %28, %cst_20 [0] : vector<24x1xf32> to vector<1xf32>
    %30 = vector.shape_cast %29 : vector<1xf32> to vector<1x1xf32>
    %31 = vector.broadcast %30 : vector<1x1xf32> to vector<24x1xf32>
    %32 = arith.subf %28, %31 : vector<24x1xf32>
    %33 = math.exp %32 : vector<24x1xf32>
    %cst_21 = arith.constant dense<0.000000e+00> : vector<1xf32>
    %34 = vector.multi_reduction <add>, %33, %cst_21 [0] : vector<24x1xf32> to vector<1xf32>
    %35 = vector.shape_cast %34 : vector<1xf32> to vector<1x1xf32>
    %36 = math.log %35 : vector<1x1xf32>
    %37 = vector.broadcast %36 : vector<1x1xf32> to vector<24x1xf32>
    %38 = arith.subf %32, %37 : vector<24x1xf32>
    %c0_22 = arith.constant 0 : index
    %c0_23 = arith.constant 0 : index
    %c0_24 = arith.constant 0 : index
    %39 = vector.load %arg8[%c0_22, %c0_23, %c0_24] : memref<1x24x2xf32, #tpu.memory_space<vmem>>, vector<1x24x1xf32>
    %40 = vector.shape_cast %39 : vector<1x24x1xf32> to vector<24x1xf32>
    %41 = vector.shape_cast %38 : vector<24x1xf32> to vector<1x24x1xf32>
    tpu.vector_store %arg8[%c0_22, %c0_23, %c0_24], %41 {strides = array<i32>} : memref<1x24x2xf32, #tpu.memory_space<vmem>>, vector<1x24x1xf32>,
    %cst_25 = arith.constant -1.000000e+30 : f32
    %42 = vector.broadcast %cst_25 : f32 to vector<24x1xf32>
    %43 = arith.select %13, %26, %42 : vector<24x1xi1>, vector<24x1xf32>
    %cst_26 = arith.constant dense<0xFF800000> : vector<1xf32>
    %44 = vector.multi_reduction <maximumf>, %43, %cst_26 [0] : vector<24x1xf32> to vector<1xf32>
    %45 = vector.shape_cast %44 : vector<1xf32> to vector<1x1xf32>
    %46 = vector.broadcast %45 : vector<1x1xf32> to vector<24x1xf32>
    %47 = arith.subf %43, %46 : vector<24x1xf32>
    %48 = math.exp %47 : vector<24x1xf32>
    %cst_27 = arith.constant dense<0.000000e+00> : vector<1xf32>
    %49 = vector.multi_reduction <add>, %48, %cst_27 [0] : vector<24x1xf32> to vector<1xf32>
    %50 = vector.shape_cast %49 : vector<1xf32> to vector<1x1xf32>
    %51 = math.log %50 : vector<1x1xf32>
    %52 = vector.broadcast %51 : vector<1x1xf32> to vector<24x1xf32>
    %53 = arith.subf %47, %52 : vector<24x1xf32>
    %c0_28 = arith.constant 0 : index
    %c0_29 = arith.constant 0 : index
    %c1_30 = arith.constant 1 : index
    %54 = vector.load %arg8[%c0_28, %c0_29, %c1_30] : memref<1x24x2xf32, #tpu.memory_space<vmem>>, vector<1x24x1xf32>
    %55 = vector.shape_cast %54 : vector<1x24x1xf32> to vector<24x1xf32>
    %56 = vector.shape_cast %53 : vector<24x1xf32> to vector<1x24x1xf32>
    tpu.vector_store %arg8[%c0_28, %c0_29, %c1_30], %56 {strides = array<i32>} : memref<1x24x2xf32, #tpu.memory_space<vmem>>, vector<1x24x1xf32>,
    return
  }
  func.func @transform_0(%arg0: i32) -> (i32, i32, i32) {
    %c0_i32 = arith.constant 0 : i32
    %c0_i32_0 = arith.constant 0 : i32
    %c0_i32_1 = arith.constant 0 : i32
    return %arg0, %c0_i32, %c0_i32_0 : i32, i32, i32
  }
  func.func @transform_1(%arg0: i32) -> (i32, i32, i32) {
    %c0_i32 = arith.constant 0 : i32
    %c0_i32_0 = arith.constant 0 : i32
    %c0_i32_1 = arith.constant 0 : i32
    return %arg0, %c0_i32, %c0_i32_0 : i32, i32, i32
  }
  func.func @transform_2(%arg0: i32) -> (i32, i32, i32) {
    %c0_i32 = arith.constant 0 : i32
    %c0_i32_0 = arith.constant 0 : i32
    %c0_i32_1 = arith.constant 0 : i32
    return %arg0, %c0_i32, %c0_i32_0 : i32, i32, i32
  }
  func.func @transform_3(%arg0: i32) -> (i32, i32, i32) {
    %c0_i32 = arith.constant 0 : i32
    %c0_i32_0 = arith.constant 0 : i32
    %c0_i32_1 = arith.constant 0 : i32
    return %arg0, %c0_i32, %c0_i32_0 : i32, i32, i32
  }
  func.func @transform_4(%arg0: i32) -> (i32, i32) {
    %c0_i32 = arith.constant 0 : i32
    %c0_i32_0 = arith.constant 0 : i32
    %c0_i32_1 = arith.constant 0 : i32
    return %c0_i32, %c0_i32_0 : i32, i32
  }
  func.func @transform_5(%arg0: i32) -> (i32, i32) {
    %c0_i32 = arith.constant 0 : i32
    %c0_i32_0 = arith.constant 0 : i32
    %c0_i32_1 = arith.constant 0 : i32
    return %c0_i32, %c0_i32_0 : i32, i32
  }
  func.func @transform_6(%arg0: i32) -> i32 {
    %c0_i32 = arith.constant 0 : i32
    %c0_i32_0 = arith.constant 0 : i32
    return %c0_i32 : i32
  }
  func.func @transform_7(%arg0: i32) -> (i32, i32, i32) {
    %c0_i32 = arith.constant 0 : i32
    %c0_i32_0 = arith.constant 0 : i32
    %c0_i32_1 = arith.constant 0 : i32
    return %arg0, %c0_i32, %c0_i32_0 : i32, i32, i32
  }
}

module attributes {stable_mosaic.version = 11 : i64} {
  func.func @_bilstm_kernel(%arg0: i32, %arg1: memref<2xi32, #tpu.memory_space<smem>>, %arg2: memref<1x24x32xf32, #tpu.memory_space<vmem>>, %arg3: memref<32x64xf32, #tpu.memory_space<vmem>>, %arg4: memref<16x64xf32, #tpu.memory_space<vmem>>, %arg5: memref<1x64xf32, #tpu.memory_space<vmem>>, %arg6: memref<32x64xf32, #tpu.memory_space<vmem>>, %arg7: memref<16x64xf32, #tpu.memory_space<vmem>>, %arg8: memref<1x64xf32, #tpu.memory_space<vmem>>, %arg9: memref<1x24x32xf32, #tpu.memory_space<vmem>>, %arg10: memref<24x64xf32, #tpu.memory_space<vmem>>, %arg11: memref<1x16xf32, #tpu.memory_space<vmem>>, %arg12: memref<1x16xf32, #tpu.memory_space<vmem>>) attributes {dimension_semantics = [#tpu.dimension_semantics<parallel>], iteration_bounds = array<i64: 2>, scalar_prefetch = 1 : i64, scratch_operands = 3 : i64, tpu.core_type = #tpu.core_type<tc>, window_params = [{transform_indices = @transform_0, window_bounds = array<i64: 1, 24, 32>}, {pipeline_mode = #tpu.pipeline_mode<synchronous>, transform_indices = @transform_1, window_bounds = array<i64: 32, 64>}, {pipeline_mode = #tpu.pipeline_mode<synchronous>, transform_indices = @transform_2, window_bounds = array<i64: 16, 64>}, {pipeline_mode = #tpu.pipeline_mode<synchronous>, transform_indices = @transform_3, window_bounds = array<i64: 1, 64>}, {pipeline_mode = #tpu.pipeline_mode<synchronous>, transform_indices = @transform_4, window_bounds = array<i64: 32, 64>}, {pipeline_mode = #tpu.pipeline_mode<synchronous>, transform_indices = @transform_5, window_bounds = array<i64: 16, 64>}, {pipeline_mode = #tpu.pipeline_mode<synchronous>, transform_indices = @transform_6, window_bounds = array<i64: 1, 64>}, {transform_indices = @transform_7, window_bounds = array<i64: 1, 24, 32>}]} {
    %0 = arith.index_cast %arg0 : i32 to index
    %1 = memref.load %arg1[%0] : memref<2xi32, #tpu.memory_space<smem>>
    %c0 = arith.constant 0 : index
    %c0_0 = arith.constant 0 : index
    %c0_1 = arith.constant 0 : index
    %2 = vector.load %arg2[%c0, %c0_0, %c0_1] : memref<1x24x32xf32, #tpu.memory_space<vmem>>, vector<1x24x32xf32>
    %3 = vector.shape_cast %2 : vector<1x24x32xf32> to vector<24x32xf32>
    %c0_2 = arith.constant 0 : index
    %c0_3 = arith.constant 0 : index
    %4 = vector.load %arg3[%c0_2, %c0_3] : memref<32x64xf32, #tpu.memory_space<vmem>>, vector<32x64xf32>
    %cst = arith.constant dense<0.000000e+00> : vector<24x64xf32>
    %5 = tpu.matmul %3, %4, %cst {dimension_numbers = #tpu.dot_dimension_numbers<[1], [0], [0], [1], [0, 0, 1, 1], [], []>} : vector<24x32xf32>, vector<32x64xf32>, vector<24x64xf32> -> vector<24x64xf32>
    %c0_4 = arith.constant 0 : index
    %c0_5 = arith.constant 0 : index
    %6 = vector.load %arg5[%c0_4, %c0_5] : memref<1x64xf32, #tpu.memory_space<vmem>>, vector<1x64xf32>
    %7 = vector.broadcast %6 : vector<1x64xf32> to vector<24x64xf32>
    %8 = arith.addf %5, %7 : vector<24x64xf32>
    %c0_6 = arith.constant 0 : index
    %c0_7 = arith.constant 0 : index
    %9 = vector.load %arg10[%c0_6, %c0_7] : memref<24x64xf32, #tpu.memory_space<vmem>>, vector<24x64xf32>
    tpu.vector_store %arg10[%c0_6, %c0_7], %8 {strides = array<i32>} : memref<24x64xf32, #tpu.memory_space<vmem>>, vector<24x64xf32>,
    %cst_8 = arith.constant 0.000000e+00 : f32
    %10 = vector.broadcast %cst_8 : f32 to vector<1x16xf32>
    %c0_9 = arith.constant 0 : index
    %c0_10 = arith.constant 0 : index
    %11 = vector.load %arg11[%c0_9, %c0_10] : memref<1x16xf32, #tpu.memory_space<vmem>>, vector<1x16xf32>
    tpu.vector_store %arg11[%c0_9, %c0_10], %10 {strides = array<i32>} : memref<1x16xf32, #tpu.memory_space<vmem>>, vector<1x16xf32>,
    %cst_11 = arith.constant 0.000000e+00 : f32
    %12 = vector.broadcast %cst_11 : f32 to vector<1x16xf32>
    %c0_12 = arith.constant 0 : index
    %c0_13 = arith.constant 0 : index
    %13 = vector.load %arg12[%c0_12, %c0_13] : memref<1x16xf32, #tpu.memory_space<vmem>>, vector<1x16xf32>
    tpu.vector_store %arg12[%c0_12, %c0_13], %12 {strides = array<i32>} : memref<1x16xf32, #tpu.memory_space<vmem>>, vector<1x16xf32>,
    %c0_14 = arith.constant 0 : index
    %c0_15 = arith.constant 0 : index
    %14 = vector.load %arg4[%c0_14, %c0_15] : memref<16x64xf32, #tpu.memory_space<vmem>>, vector<16x64xf32>
    %c0_i32 = arith.constant 0 : i32
    %c24_i32 = arith.constant 24 : i32
    %15 = arith.addi %c0_i32, %c24_i32 : i32
    %c1_i32 = arith.constant 1 : i32
    scf.for %arg13 = %c0_i32 to %15 step %c1_i32  : i32 {
      %c1_i32_36 = arith.constant 1 : i32
      %28 = arith.muli %arg13, %c1_i32_36 : i32
      %c0_i32_37 = arith.constant 0 : i32
      %29 = arith.addi %c0_i32_37, %28 : i32
      %30 = arith.index_cast %29 : i32 to index
      %c0_38 = arith.constant 0 : index
      %31 = vector.load %arg10[%30, %c0_38] : memref<24x64xf32, #tpu.memory_space<vmem>>, vector<1x64xf32>
      %c0_39 = arith.constant 0 : index
      %c0_40 = arith.constant 0 : index
      %32 = vector.load %arg11[%c0_39, %c0_40] : memref<1x16xf32, #tpu.memory_space<vmem>>, vector<1x16xf32>
      %cst_41 = arith.constant dense<0.000000e+00> : vector<1x64xf32>
      %33 = tpu.matmul %32, %14, %cst_41 {dimension_numbers = #tpu.dot_dimension_numbers<[1], [0], [0], [1], [0, 0, 1, 1], [], []>} : vector<1x16xf32>, vector<16x64xf32>, vector<1x64xf32> -> vector<1x64xf32>
      %34 = arith.addf %31, %33 : vector<1x64xf32>
      %35 = vector.extract_strided_slice %34 {offsets = [0, 0], sizes = [1, 16], strides = [1, 1]} : vector<1x64xf32> to vector<1x16xf32>
      %cst_42 = arith.constant 0.000000e+00 : f32
      %36 = vector.broadcast %cst_42 : f32 to vector<1x16xf32>
      %37 = arith.subf %36, %35 : vector<1x16xf32>
      %38 = math.exp %37 : vector<1x16xf32>
      %cst_43 = arith.constant 1.000000e+00 : f32
      %39 = vector.broadcast %cst_43 : f32 to vector<1x16xf32>
      %40 = arith.addf %39, %38 : vector<1x16xf32>
      %cst_44 = arith.constant 1.000000e+00 : f32
      %41 = vector.broadcast %cst_44 : f32 to vector<1x16xf32>
      %42 = arith.divf %41, %40 : vector<1x16xf32>
      %43 = vector.extract_strided_slice %34 {offsets = [0, 16], sizes = [1, 16], strides = [1, 1]} : vector<1x64xf32> to vector<1x16xf32>
      %cst_45 = arith.constant 0.000000e+00 : f32
      %44 = vector.broadcast %cst_45 : f32 to vector<1x16xf32>
      %45 = arith.subf %44, %43 : vector<1x16xf32>
      %46 = math.exp %45 : vector<1x16xf32>
      %cst_46 = arith.constant 1.000000e+00 : f32
      %47 = vector.broadcast %cst_46 : f32 to vector<1x16xf32>
      %48 = arith.addf %47, %46 : vector<1x16xf32>
      %cst_47 = arith.constant 1.000000e+00 : f32
      %49 = vector.broadcast %cst_47 : f32 to vector<1x16xf32>
      %50 = arith.divf %49, %48 : vector<1x16xf32>
      %51 = vector.extract_strided_slice %34 {offsets = [0, 32], sizes = [1, 16], strides = [1, 1]} : vector<1x64xf32> to vector<1x16xf32>
      %52 = math.tanh %51 : vector<1x16xf32>
      %53 = vector.extract_strided_slice %34 {offsets = [0, 48], sizes = [1, 16], strides = [1, 1]} : vector<1x64xf32> to vector<1x16xf32>
      %cst_48 = arith.constant 0.000000e+00 : f32
      %54 = vector.broadcast %cst_48 : f32 to vector<1x16xf32>
      %55 = arith.subf %54, %53 : vector<1x16xf32>
      %56 = math.exp %55 : vector<1x16xf32>
      %cst_49 = arith.constant 1.000000e+00 : f32
      %57 = vector.broadcast %cst_49 : f32 to vector<1x16xf32>
      %58 = arith.addf %57, %56 : vector<1x16xf32>
      %cst_50 = arith.constant 1.000000e+00 : f32
      %59 = vector.broadcast %cst_50 : f32 to vector<1x16xf32>
      %60 = arith.divf %59, %58 : vector<1x16xf32>
      %c0_51 = arith.constant 0 : index
      %c0_52 = arith.constant 0 : index
      %61 = vector.load %arg12[%c0_51, %c0_52] : memref<1x16xf32, #tpu.memory_space<vmem>>, vector<1x16xf32>
      %62 = arith.mulf %50, %61 : vector<1x16xf32>
      %63 = arith.mulf %42, %52 : vector<1x16xf32>
      %64 = arith.addf %62, %63 : vector<1x16xf32>
      %65 = math.tanh %64 : vector<1x16xf32>
      %66 = arith.mulf %60, %65 : vector<1x16xf32>
      %67 = arith.cmpi slt, %29, %1 : i32
      %68 = arith.extui %67 : i1 to i32
      %69 = arith.sitofp %68 : i32 to f32
      %70 = vector.broadcast %69 : f32 to vector<1x16xf32>
      %71 = arith.mulf %70, %66 : vector<1x16xf32>
      %cst_53 = arith.constant 1.000000e+00 : f32
      %72 = arith.subf %cst_53, %69 : f32
      %c0_54 = arith.constant 0 : index
      %c0_55 = arith.constant 0 : index
      %73 = vector.load %arg11[%c0_54, %c0_55] : memref<1x16xf32, #tpu.memory_space<vmem>>, vector<1x16xf32>
      %74 = vector.broadcast %72 : f32 to vector<1x16xf32>
      %75 = arith.mulf %74, %73 : vector<1x16xf32>
      %76 = arith.addf %71, %75 : vector<1x16xf32>
      %77 = vector.broadcast %69 : f32 to vector<1x16xf32>
      %78 = arith.mulf %77, %64 : vector<1x16xf32>
      %cst_56 = arith.constant 1.000000e+00 : f32
      %79 = arith.subf %cst_56, %69 : f32
      %c0_57 = arith.constant 0 : index
      %c0_58 = arith.constant 0 : index
      %80 = vector.load %arg12[%c0_57, %c0_58] : memref<1x16xf32, #tpu.memory_space<vmem>>, vector<1x16xf32>
      %81 = vector.broadcast %79 : f32 to vector<1x16xf32>
      %82 = arith.mulf %81, %80 : vector<1x16xf32>
      %83 = arith.addf %78, %82 : vector<1x16xf32>
      %c0_59 = arith.constant 0 : index
      %c0_60 = arith.constant 0 : index
      %84 = vector.load %arg11[%c0_59, %c0_60] : memref<1x16xf32, #tpu.memory_space<vmem>>, vector<1x16xf32>
      tpu.vector_store %arg11[%c0_59, %c0_60], %76 {strides = array<i32>} : memref<1x16xf32, #tpu.memory_space<vmem>>, vector<1x16xf32>,
      %c0_61 = arith.constant 0 : index
      %c0_62 = arith.constant 0 : index
      %85 = vector.load %arg12[%c0_61, %c0_62] : memref<1x16xf32, #tpu.memory_space<vmem>>, vector<1x16xf32>
      tpu.vector_store %arg12[%c0_61, %c0_62], %83 {strides = array<i32>} : memref<1x16xf32, #tpu.memory_space<vmem>>, vector<1x16xf32>,
      %86 = vector.broadcast %69 : f32 to vector<1x16xf32>
      %87 = arith.mulf %86, %76 : vector<1x16xf32>
      %c0_63 = arith.constant 0 : index
      %88 = arith.index_cast %29 : i32 to index
      %c0_64 = arith.constant 0 : index
      %89 = vector.load %arg9[%c0_63, %88, %c0_64] : memref<1x24x32xf32, #tpu.memory_space<vmem>>, vector<1x1x16xf32>
      %90 = vector.shape_cast %89 : vector<1x1x16xf32> to vector<1x16xf32>
      %91 = vector.shape_cast %87 : vector<1x16xf32> to vector<1x1x16xf32>
      tpu.vector_store %arg9[%c0_63, %88, %c0_64], %91 {strides = array<i32>} : memref<1x24x32xf32, #tpu.memory_space<vmem>>, vector<1x1x16xf32>,
    }
    %c24_i32_16 = arith.constant 24 : i32
    %c0_17 = arith.constant 0 : index
    %c0_18 = arith.constant 0 : index
    %16 = vector.load %arg6[%c0_17, %c0_18] : memref<32x64xf32, #tpu.memory_space<vmem>>, vector<32x64xf32>
    %cst_19 = arith.constant dense<0.000000e+00> : vector<24x64xf32>
    %17 = tpu.matmul %3, %16, %cst_19 {dimension_numbers = #tpu.dot_dimension_numbers<[1], [0], [0], [1], [0, 0, 1, 1], [], []>} : vector<24x32xf32>, vector<32x64xf32>, vector<24x64xf32> -> vector<24x64xf32>
    %c0_20 = arith.constant 0 : index
    %c0_21 = arith.constant 0 : index
    %18 = vector.load %arg8[%c0_20, %c0_21] : memref<1x64xf32, #tpu.memory_space<vmem>>, vector<1x64xf32>
    %19 = vector.broadcast %18 : vector<1x64xf32> to vector<24x64xf32>
    %20 = arith.addf %17, %19 : vector<24x64xf32>
    %c0_22 = arith.constant 0 : index
    %c0_23 = arith.constant 0 : index
    %21 = vector.load %arg10[%c0_22, %c0_23] : memref<24x64xf32, #tpu.memory_space<vmem>>, vector<24x64xf32>
    tpu.vector_store %arg10[%c0_22, %c0_23], %20 {strides = array<i32>} : memref<24x64xf32, #tpu.memory_space<vmem>>, vector<24x64xf32>,
    %cst_24 = arith.constant 0.000000e+00 : f32
    %22 = vector.broadcast %cst_24 : f32 to vector<1x16xf32>
    %c0_25 = arith.constant 0 : index
    %c0_26 = arith.constant 0 : index
    %23 = vector.load %arg11[%c0_25, %c0_26] : memref<1x16xf32, #tpu.memory_space<vmem>>, vector<1x16xf32>
    tpu.vector_store %arg11[%c0_25, %c0_26], %22 {strides = array<i32>} : memref<1x16xf32, #tpu.memory_space<vmem>>, vector<1x16xf32>,
    %cst_27 = arith.constant 0.000000e+00 : f32
    %24 = vector.broadcast %cst_27 : f32 to vector<1x16xf32>
    %c0_28 = arith.constant 0 : index
    %c0_29 = arith.constant 0 : index
    %25 = vector.load %arg12[%c0_28, %c0_29] : memref<1x16xf32, #tpu.memory_space<vmem>>, vector<1x16xf32>
    tpu.vector_store %arg12[%c0_28, %c0_29], %24 {strides = array<i32>} : memref<1x16xf32, #tpu.memory_space<vmem>>, vector<1x16xf32>,
    %c0_30 = arith.constant 0 : index
    %c0_31 = arith.constant 0 : index
    %26 = vector.load %arg7[%c0_30, %c0_31] : memref<16x64xf32, #tpu.memory_space<vmem>>, vector<16x64xf32>
    %c0_i32_32 = arith.constant 0 : i32
    %c24_i32_33 = arith.constant 24 : i32
    %27 = arith.addi %c0_i32_32, %c24_i32_33 : i32
    %c1_i32_34 = arith.constant 1 : i32
    scf.for %arg13 = %c0_i32_32 to %27 step %c1_i32_34  : i32 {
      %c1_i32_36 = arith.constant 1 : i32
      %28 = arith.muli %arg13, %c1_i32_36 : i32
      %c0_i32_37 = arith.constant 0 : i32
      %29 = arith.addi %c0_i32_37, %28 : i32
      %c23_i32 = arith.constant 23 : i32
      %30 = arith.subi %c23_i32, %29 : i32
      %31 = arith.index_cast %30 : i32 to index
      %c0_38 = arith.constant 0 : index
      %32 = vector.load %arg10[%31, %c0_38] : memref<24x64xf32, #tpu.memory_space<vmem>>, vector<1x64xf32>
      %c0_39 = arith.constant 0 : index
      %c0_40 = arith.constant 0 : index
      %33 = vector.load %arg11[%c0_39, %c0_40] : memref<1x16xf32, #tpu.memory_space<vmem>>, vector<1x16xf32>
      %cst_41 = arith.constant dense<0.000000e+00> : vector<1x64xf32>
      %34 = tpu.matmul %33, %26, %cst_41 {dimension_numbers = #tpu.dot_dimension_numbers<[1], [0], [0], [1], [0, 0, 1, 1], [], []>} : vector<1x16xf32>, vector<16x64xf32>, vector<1x64xf32> -> vector<1x64xf32>
      %35 = arith.addf %32, %34 : vector<1x64xf32>
      %36 = vector.extract_strided_slice %35 {offsets = [0, 0], sizes = [1, 16], strides = [1, 1]} : vector<1x64xf32> to vector<1x16xf32>
      %cst_42 = arith.constant 0.000000e+00 : f32
      %37 = vector.broadcast %cst_42 : f32 to vector<1x16xf32>
      %38 = arith.subf %37, %36 : vector<1x16xf32>
      %39 = math.exp %38 : vector<1x16xf32>
      %cst_43 = arith.constant 1.000000e+00 : f32
      %40 = vector.broadcast %cst_43 : f32 to vector<1x16xf32>
      %41 = arith.addf %40, %39 : vector<1x16xf32>
      %cst_44 = arith.constant 1.000000e+00 : f32
      %42 = vector.broadcast %cst_44 : f32 to vector<1x16xf32>
      %43 = arith.divf %42, %41 : vector<1x16xf32>
      %44 = vector.extract_strided_slice %35 {offsets = [0, 16], sizes = [1, 16], strides = [1, 1]} : vector<1x64xf32> to vector<1x16xf32>
      %cst_45 = arith.constant 0.000000e+00 : f32
      %45 = vector.broadcast %cst_45 : f32 to vector<1x16xf32>
      %46 = arith.subf %45, %44 : vector<1x16xf32>
      %47 = math.exp %46 : vector<1x16xf32>
      %cst_46 = arith.constant 1.000000e+00 : f32
      %48 = vector.broadcast %cst_46 : f32 to vector<1x16xf32>
      %49 = arith.addf %48, %47 : vector<1x16xf32>
      %cst_47 = arith.constant 1.000000e+00 : f32
      %50 = vector.broadcast %cst_47 : f32 to vector<1x16xf32>
      %51 = arith.divf %50, %49 : vector<1x16xf32>
      %52 = vector.extract_strided_slice %35 {offsets = [0, 32], sizes = [1, 16], strides = [1, 1]} : vector<1x64xf32> to vector<1x16xf32>
      %53 = math.tanh %52 : vector<1x16xf32>
      %54 = vector.extract_strided_slice %35 {offsets = [0, 48], sizes = [1, 16], strides = [1, 1]} : vector<1x64xf32> to vector<1x16xf32>
      %cst_48 = arith.constant 0.000000e+00 : f32
      %55 = vector.broadcast %cst_48 : f32 to vector<1x16xf32>
      %56 = arith.subf %55, %54 : vector<1x16xf32>
      %57 = math.exp %56 : vector<1x16xf32>
      %cst_49 = arith.constant 1.000000e+00 : f32
      %58 = vector.broadcast %cst_49 : f32 to vector<1x16xf32>
      %59 = arith.addf %58, %57 : vector<1x16xf32>
      %cst_50 = arith.constant 1.000000e+00 : f32
      %60 = vector.broadcast %cst_50 : f32 to vector<1x16xf32>
      %61 = arith.divf %60, %59 : vector<1x16xf32>
      %c0_51 = arith.constant 0 : index
      %c0_52 = arith.constant 0 : index
      %62 = vector.load %arg12[%c0_51, %c0_52] : memref<1x16xf32, #tpu.memory_space<vmem>>, vector<1x16xf32>
      %63 = arith.mulf %51, %62 : vector<1x16xf32>
      %64 = arith.mulf %43, %53 : vector<1x16xf32>
      %65 = arith.addf %63, %64 : vector<1x16xf32>
      %66 = math.tanh %65 : vector<1x16xf32>
      %67 = arith.mulf %61, %66 : vector<1x16xf32>
      %68 = arith.cmpi slt, %30, %1 : i32
      %69 = arith.extui %68 : i1 to i32
      %70 = arith.sitofp %69 : i32 to f32
      %71 = vector.broadcast %70 : f32 to vector<1x16xf32>
      %72 = arith.mulf %71, %67 : vector<1x16xf32>
      %cst_53 = arith.constant 1.000000e+00 : f32
      %73 = arith.subf %cst_53, %70 : f32
      %c0_54 = arith.constant 0 : index
      %c0_55 = arith.constant 0 : index
      %74 = vector.load %arg11[%c0_54, %c0_55] : memref<1x16xf32, #tpu.memory_space<vmem>>, vector<1x16xf32>
      %75 = vector.broadcast %73 : f32 to vector<1x16xf32>
      %76 = arith.mulf %75, %74 : vector<1x16xf32>
      %77 = arith.addf %72, %76 : vector<1x16xf32>
      %78 = vector.broadcast %70 : f32 to vector<1x16xf32>
      %79 = arith.mulf %78, %65 : vector<1x16xf32>
      %cst_56 = arith.constant 1.000000e+00 : f32
      %80 = arith.subf %cst_56, %70 : f32
      %c0_57 = arith.constant 0 : index
      %c0_58 = arith.constant 0 : index
      %81 = vector.load %arg12[%c0_57, %c0_58] : memref<1x16xf32, #tpu.memory_space<vmem>>, vector<1x16xf32>
      %82 = vector.broadcast %80 : f32 to vector<1x16xf32>
      %83 = arith.mulf %82, %81 : vector<1x16xf32>
      %84 = arith.addf %79, %83 : vector<1x16xf32>
      %c0_59 = arith.constant 0 : index
      %c0_60 = arith.constant 0 : index
      %85 = vector.load %arg11[%c0_59, %c0_60] : memref<1x16xf32, #tpu.memory_space<vmem>>, vector<1x16xf32>
      tpu.vector_store %arg11[%c0_59, %c0_60], %77 {strides = array<i32>} : memref<1x16xf32, #tpu.memory_space<vmem>>, vector<1x16xf32>,
      %c0_61 = arith.constant 0 : index
      %c0_62 = arith.constant 0 : index
      %86 = vector.load %arg12[%c0_61, %c0_62] : memref<1x16xf32, #tpu.memory_space<vmem>>, vector<1x16xf32>
      tpu.vector_store %arg12[%c0_61, %c0_62], %84 {strides = array<i32>} : memref<1x16xf32, #tpu.memory_space<vmem>>, vector<1x16xf32>,
      %87 = vector.broadcast %70 : f32 to vector<1x16xf32>
      %88 = arith.mulf %87, %77 : vector<1x16xf32>
      %c0_63 = arith.constant 0 : index
      %89 = arith.index_cast %30 : i32 to index
      %c16 = arith.constant 16 : index
      %90 = vector.load %arg9[%c0_63, %89, %c16] : memref<1x24x32xf32, #tpu.memory_space<vmem>>, vector<1x1x16xf32>
      %91 = vector.shape_cast %90 : vector<1x1x16xf32> to vector<1x16xf32>
      %92 = vector.shape_cast %88 : vector<1x16xf32> to vector<1x1x16xf32>
      tpu.vector_store %arg9[%c0_63, %89, %c16], %92 {strides = array<i32>} : memref<1x24x32xf32, #tpu.memory_space<vmem>>, vector<1x1x16xf32>,
    }
    %c24_i32_35 = arith.constant 24 : i32
    return
  }
  func.func @transform_0(%arg0: i32, %arg1: memref<2xi32, #tpu.memory_space<smem>>) -> (i32, i32, i32) {
    %c0_i32 = arith.constant 0 : i32
    %c0_i32_0 = arith.constant 0 : i32
    %c0_i32_1 = arith.constant 0 : i32
    return %arg0, %c0_i32, %c0_i32_0 : i32, i32, i32
  }
  func.func @transform_1(%arg0: i32, %arg1: memref<2xi32, #tpu.memory_space<smem>>) -> (i32, i32) {
    %c0_i32 = arith.constant 0 : i32
    %c0_i32_0 = arith.constant 0 : i32
    %c0_i32_1 = arith.constant 0 : i32
    return %c0_i32, %c0_i32_0 : i32, i32
  }
  func.func @transform_2(%arg0: i32, %arg1: memref<2xi32, #tpu.memory_space<smem>>) -> (i32, i32) {
    %c0_i32 = arith.constant 0 : i32
    %c0_i32_0 = arith.constant 0 : i32
    %c0_i32_1 = arith.constant 0 : i32
    return %c0_i32, %c0_i32_0 : i32, i32
  }
  func.func @transform_3(%arg0: i32, %arg1: memref<2xi32, #tpu.memory_space<smem>>) -> (i32, i32) {
    %c0_i32 = arith.constant 0 : i32
    %c0_i32_0 = arith.constant 0 : i32
    %c0_i32_1 = arith.constant 0 : i32
    return %c0_i32, %c0_i32_0 : i32, i32
  }
  func.func @transform_4(%arg0: i32, %arg1: memref<2xi32, #tpu.memory_space<smem>>) -> (i32, i32) {
    %c0_i32 = arith.constant 0 : i32
    %c0_i32_0 = arith.constant 0 : i32
    %c0_i32_1 = arith.constant 0 : i32
    return %c0_i32, %c0_i32_0 : i32, i32
  }
  func.func @transform_5(%arg0: i32, %arg1: memref<2xi32, #tpu.memory_space<smem>>) -> (i32, i32) {
    %c0_i32 = arith.constant 0 : i32
    %c0_i32_0 = arith.constant 0 : i32
    %c0_i32_1 = arith.constant 0 : i32
    return %c0_i32, %c0_i32_0 : i32, i32
  }
  func.func @transform_6(%arg0: i32, %arg1: memref<2xi32, #tpu.memory_space<smem>>) -> (i32, i32) {
    %c0_i32 = arith.constant 0 : i32
    %c0_i32_0 = arith.constant 0 : i32
    %c0_i32_1 = arith.constant 0 : i32
    return %c0_i32, %c0_i32_0 : i32, i32
  }
  func.func @transform_7(%arg0: i32, %arg1: memref<2xi32, #tpu.memory_space<smem>>) -> (i32, i32, i32) {
    %c0_i32 = arith.constant 0 : i32
    %c0_i32_0 = arith.constant 0 : i32
    %c0_i32_1 = arith.constant 0 : i32
    return %arg0, %c0_i32, %c0_i32_0 : i32, i32, i32
  }
}

</mosaic_0001>

<llo_original>
// kernel: bidaf_output.3
$region0: #{bidaf_output.3}
  #allocation0 [shape = 'u32[]', space=smem, size = 0x4, offset = 0x4, fixed_abs, tag = 'smem constant byte address 0x4 - core index']
  #allocation1 [shape = 'u32[144,128]{1,0:T(1,128)}', space=vmem, size = 0x12000, scoped, tag = 'internal scratch']
  %s0 = inlined_call_operand.vmem [shape: f32[2,24,128], index: 0, kind: input, shape index: {}]
  %s1 = inlined_call_operand.vmem [shape: f32[2,24,32], index: 1, kind: input, shape index: {}]
  %s2 = inlined_call_operand.vmem [shape: f32[2,24,32], index: 2, kind: input, shape index: {}]
  %s3 = inlined_call_operand.vmem [shape: f32[2,24,1], index: 3, kind: input, shape index: {}]
  %s4 = inlined_call_operand.vmem [shape: f32[128,2], index: 4, kind: input, shape index: {}]
  %s5 = inlined_call_operand.vmem [shape: f32[32,2], index: 5, kind: input, shape index: {}]
  %s6 = inlined_call_operand.vmem [shape: f32[2], index: 6, kind: input, shape index: {}]
  %s7 = inlined_call_operand.vmem [shape: f32[2,24,2], index: 7, kind: output, shape index: {}]
  %s8 = sld [smem:[#allocation0]]
  $region65: #{bidaf_output.3} parent=0
    _
  %s10 = ssub.s32 1, %s8
  %s11 = scalar_select 0, %s10, %s8
  $region1: #{bidaf_output.3} parent=0
    #allocation2 [shape = 'u8[512]{0}', space=smem, size = 0x200, scoped, tag = 'input window, operand 6, single buffered']
    #allocation3 [shape = 's32[2]{0}', space=sflag, size = 0x8, scoped, tag = 'scoped memory for bidaf_output.3']
    %12 = vsyncpa [#allocation3], 0
    loop: start=0, step=1, limit=4
    $region2: #{bidaf_output.3} parent=1 // loop_pre_header
      _
    $region3: #{bidaf_output.3} parent=1 // loop_header
      %s14 = sphi 0, %s18
      %p15 = scmp.ge.s32.totalorder %s14, 4
      %s24 = sphi 0, %s26
      %s27 = sphi 0, %s24
      %s28 = sphi 0, %s27
      %s44 = sphi 0, %s28
      %s50 = sphi 0, %s52
      %s53 = sphi 0, %s50
      %s54 = sphi 0, %s53
      %s70 = sphi 0, %s54
      %s76 = sphi 0, %s78
      %s79 = sphi 0, %s76
      %s80 = sphi 0, %s79
      %s96 = sphi 0, %s80
      %s102 = sphi 0, %s104
      %s105 = sphi 0, %s102
      %s106 = sphi 0, %s105
      %s122 = sphi 0, %s106
      %s126 = sphi 0, %s126
      %s128 = sphi 0, %s126
      %s129 = sphi 0, %s128
      %s143 = sphi 0, %s129
      %s147 = sphi 0, %s147
      %s149 = sphi 0, %s147
      %s150 = sphi 0, %s149
      %s164 = sphi 0, %s150
      %s168 = sphi 0, %s168
      %s170 = sphi 0, %s168
      %s171 = sphi 0, %s170
      %s185 = sphi 0, %s171
      %s191 = sphi 0, %s193
      %s194 = sphi 0, %s191
      %s195 = sphi 0, %s194
      %s211 = sphi 0, %s195
    $region4: #{bidaf_output.3} parent=1 // loop_header_branch
      %17 = sbr.rel (%p15) target = $region8
    $region5: #{bidaf_output.3} parent=1 // loop_body
      %s19 = ssub.s32 %s14, 1
      %s20 = ssub.s32 %s14, 2
      %s21 = sadd.s32 %s14, 1
      %s22 = ssub.s32 %s14, %s21
      %p23 = scmp.eq.s32.totalorder %s22, 0
      %s25 = sadd.s32 %s24, 1
      %s26 = scalar_select %p23, %s24, %s25
      %p29 = pneg %p23
      %p30 = scmp.eq.s32.totalorder %s14, 1
      %p31 = por %p29, %p30
      %p32 = scmp.ne.s32.totalorder %s24, %s27
      %p33 = scmp.eq.s32.totalorder %s14, 0
      %p34 = por %p32, %p33
      %p35 = scmp.ne.s32.totalorder %s24, %s27
      %p36 = scmp.eq.s32.totalorder %s19, 1
      %p37 = por %p35, %p36
      %p38 = scmp.ne.s32.totalorder %s27, %s28
      %p39 = scmp.eq.s32.totalorder %s19, 0
      %p40 = por %p38, %p39
      %p41 = scmp.ne.s32.totalorder %s27, %s28
      %p42 = scmp.eq.s32.totalorder %s20, 1
      %p43 = por %p41, %p42
      %p45 = scmp.ne.s32.totalorder %s28, %s44
      %p46 = scmp.eq.s32.totalorder %s20, 0
      %p47 = por %p45, %p46
      %s48 = ssub.s32 %s14, %s21
      %p49 = scmp.eq.s32.totalorder %s48, 0
      %s51 = sadd.s32 %s50, 1
      %s52 = scalar_select %p49, %s50, %s51
      %p55 = pneg %p49
      %p56 = scmp.eq.s32.totalorder %s14, 1
      %p57 = por %p55, %p56
      %p58 = scmp.ne.s32.totalorder %s50, %s53
      %p59 = scmp.eq.s32.totalorder %s14, 0
      %p60 = por %p58, %p59
      %p61 = scmp.ne.s32.totalorder %s50, %s53
      %p62 = scmp.eq.s32.totalorder %s19, 1
      %p63 = por %p61, %p62
      %p64 = scmp.ne.s32.totalorder %s53, %s54
      %p65 = scmp.eq.s32.totalorder %s19, 0
      %p66 = por %p64, %p65
      %p67 = scmp.ne.s32.totalorder %s53, %s54
      %p68 = scmp.eq.s32.totalorder %s20, 1
      %p69 = por %p67, %p68
      %p71 = scmp.ne.s32.totalorder %s54, %s70
      %p72 = scmp.eq.s32.totalorder %s20, 0
      %p73 = por %p71, %p72
      %s74 = ssub.s32 %s14, %s21
      %p75 = scmp.eq.s32.totalorder %s74, 0
      %s77 = sadd.s32 %s76, 1
      %s78 = scalar_select %p75, %s76, %s77
      %p81 = pneg %p75
      %p82 = scmp.eq.s32.totalorder %s14, 1
      %p83 = por %p81, %p82
      %p84 = scmp.ne.s32.totalorder %s76, %s79
      %p85 = scmp.eq.s32.totalorder %s14, 0
      %p86 = por %p84, %p85
      %p87 = scmp.ne.s32.totalorder %s76, %s79
      %p88 = scmp.eq.s32.totalorder %s19, 1
      %p89 = por %p87, %p88
      %p90 = scmp.ne.s32.totalorder %s79, %s80
      %p91 = scmp.eq.s32.totalorder %s19, 0
      %p92 = por %p90, %p91
      %p93 = scmp.ne.s32.totalorder %s79, %s80
      %p94 = scmp.eq.s32.totalorder %s20, 1
      %p95 = por %p93, %p94
      %p97 = scmp.ne.s32.totalorder %s80, %s96
      %p98 = scmp.eq.s32.totalorder %s20, 0
      %p99 = por %p97, %p98
      %s100 = ssub.s32 %s14, %s21
      %p101 = scmp.eq.s32.totalorder %s100, 0
      %s103 = sadd.s32 %s102, 1
      %s104 = scalar_select %p101, %s102, %s103
      %p107 = pneg %p101
      %p108 = scmp.eq.s32.totalorder %s14, 1
      %p109 = por %p107, %p108
      %p110 = scmp.ne.s32.totalorder %s102, %s105
      %p111 = scmp.eq.s32.totalorder %s14, 0
      %p112 = por %p110, %p111
      %p113 = scmp.ne.s32.totalorder %s102, %s105
      %p114 = scmp.eq.s32.totalorder %s19, 1
      %p115 = por %p113, %p114
      %p116 = scmp.ne.s32.totalorder %s105, %s106
      %p117 = scmp.eq.s32.totalorder %s19, 0
      %p118 = por %p116, %p117
      %p119 = scmp.ne.s32.totalorder %s105, %s106
      %p120 = scmp.eq.s32.totalorder %s20, 1
      %p121 = por %p119, %p120
      %p123 = scmp.ne.s32.totalorder %s106, %s122
      %p124 = scmp.eq.s32.totalorder %s20, 0
      %p125 = por %p123, %p124
      %s127 = sadd.s32 %s126, 1
      %p130 = scmp.eq.s32.totalorder %s14, 1
      %p131 = scmp.ne.s32.totalorder %s126, %s128
      %p132 = scmp.eq.s32.totalorder %s14, 0
      %p133 = por %p131, %p132
      %p134 = scmp.ne.s32.totalorder %s126, %s128
      %p135 = scmp.eq.s32.totalorder %s19, 1
      %p136 = por %p134, %p135
      %p137 = scmp.ne.s32.totalorder %s128, %s129
      %p138 = scmp.eq.s32.totalorder %s19, 0
      %p139 = por %p137, %p138
      %p140 = scmp.ne.s32.totalorder %s128, %s129
      %p141 = scmp.eq.s32.totalorder %s20, 1
      %p142 = por %p140, %p141
      %p144 = scmp.ne.s32.totalorder %s129, %s143
      %p145 = scmp.eq.s32.totalorder %s20, 0
      %p146 = por %p144, %p145
      %s148 = sadd.s32 %s147, 1
      %p151 = scmp.eq.s32.totalorder %s14, 1
      %p152 = scmp.ne.s32.totalorder %s147, %s149
      %p153 = scmp.eq.s32.totalorder %s14, 0
      %p154 = por %p152, %p153
      %p155 = scmp.ne.s32.totalorder %s147, %s149
      %p156 = scmp.eq.s32.totalorder %s19, 1
      %p157 = por %p155, %p156
      %p158 = scmp.ne.s32.totalorder %s149, %s150
      %p159 = scmp.eq.s32.totalorder %s19, 0
      %p160 = por %p158, %p159
      %p161 = scmp.ne.s32.totalorder %s149, %s150
      %p162 = scmp.eq.s32.totalorder %s20, 1
      %p163 = por %p161, %p162
      %p165 = scmp.ne.s32.totalorder %s150, %s164
      %p166 = scmp.eq.s32.totalorder %s20, 0
      %p167 = por %p165, %p166
      %s169 = sadd.s32 %s168, 1
      %p172 = scmp.eq.s32.totalorder %s14, 1
      %p173 = scmp.ne.s32.totalorder %s168, %s170
      %p174 = scmp.eq.s32.totalorder %s14, 0
      %p175 = por %p173, %p174
      %p176 = scmp.ne.s32.totalorder %s168, %s170
      %p177 = scmp.eq.s32.totalorder %s19, 1
      %p178 = por %p176, %p177
      %p179 = scmp.ne.s32.totalorder %s170, %s171
      %p180 = scmp.eq.s32.totalorder %s19, 0
      %p181 = por %p179, %p180
      %p182 = scmp.ne.s32.totalorder %s170, %s171
      %p183 = scmp.eq.s32.totalorder %s20, 1
      %p184 = por %p182, %p183
      %p186 = scmp.ne.s32.totalorder %s171, %s185
      %p187 = scmp.eq.s32.totalorder %s20, 0
      %p188 = por %p186, %p187
      %s189 = ssub.s32 %s14, %s21
      %p190 = scmp.eq.s32.totalorder %s189, 0
      %s192 = sadd.s32 %s191, 1
      %s193 = scalar_select %p190, %s191, %s192
      %p196 = pneg %p190
      %p197 = scmp.eq.s32.totalorder %s14, 1
      %p198 = por %p196, %p197
      %p199 = scmp.ne.s32.totalorder %s191, %s194
      %p200 = scmp.eq.s32.totalorder %s14, 0
      %p201 = por %p199, %p200
      %p202 = scmp.ne.s32.totalorder %s191, %s194
      %p203 = scmp.eq.s32.totalorder %s19, 1
      %p204 = por %p202, %p203
      %p205 = scmp.ne.s32.totalorder %s194, %s195
      %p206 = scmp.eq.s32.totalorder %s19, 0
      %p207 = por %p205, %p206
      %p208 = scmp.ne.s32.totalorder %s194, %s195
      %p209 = scmp.eq.s32.totalorder %s20, 1
      %p210 = por %p208, %p209
      %p212 = scmp.ne.s32.totalorder %s195, %s211
      %p213 = scmp.eq.s32.totalorder %s20, 0
      %p214 = por %p212, %p213
      %p215 = scmp.le.s32.totalorder 1, %s14
      %p216 = scmp.lt.s32.totalorder %s14, 3
      %p217 = pnand %p215, %p216
      %p218 = pneg %p217
      // Predicated region
      $region9: #{bidaf_output.3} parent=5 // pred_check
        _
      $region10: #{bidaf_output.3} parent=5 // pred_check_branch
        %220 = sbr.rel (%p217) target = $region12
      $region11: #{bidaf_output.3} parent=5 // pred_region
        %s221 = ssub.s32 %s14, 1
        // Predicated region
        $region13: #{bidaf_output.3} parent=11 // pred_check
          %p222 = pneg %p139
        $region14: #{bidaf_output.3} parent=11 // pred_check_branch
          %224 = sbr.rel (%p222) target = $region16
        $region15: #{bidaf_output.3} parent=11 // pred_region
          _
        $region16: #{bidaf_output.3} parent=11 // pred_fallthru
          _
        // Predicated region
        $region17: #{bidaf_output.3} parent=11 // pred_check
          %p225 = pneg %p160
        $region18: #{bidaf_output.3} parent=11 // pred_check_branch
          %227 = sbr.rel (%p225) target = $region20
        $region19: #{bidaf_output.3} parent=11 // pred_region
          _
        $region20: #{bidaf_output.3} parent=11 // pred_fallthru
          _
        // Predicated region
        $region21: #{bidaf_output.3} parent=11 // pred_check
          %p228 = pneg %p181
        $region22: #{bidaf_output.3} parent=11 // pred_check_branch
          %230 = sbr.rel (%p228) target = $region24
        $region23: #{bidaf_output.3} parent=11 // pred_region
          %s232 = ssub.s32 16, 16
          %233 = vsyncadd [#allocation3], %s232
          %s235 = sshll.u32 %s6, 4
          %s236 = int_to_ptr.vmem [resolvable:$true] %s235
          %238 = dma.vmem_to_smem %s236, 16, [#allocation2], [#allocation3]
        $region24: #{bidaf_output.3} parent=11 // pred_fallthru
          _
      $region12: #{bidaf_output.3} parent=5 // pred_fallthru
        _
      %p239 = scmp.lt.s32.totalorder %s14, 2
      // Predicated region
      $region25: #{bidaf_output.3} parent=5 // pred_check
        %p240 = pneg %p239
      $region26: #{bidaf_output.3} parent=5 // pred_check_branch
        %242 = sbr.rel (%p240) target = $region28
      $region27: #{bidaf_output.3} parent=5 // pred_region
        // Predicated region
        $region29: #{bidaf_output.3} parent=27 // pred_check
          %p243 = pneg %p34
        $region30: #{bidaf_output.3} parent=27 // pred_check_branch
          %245 = sbr.rel (%p243) target = $region32
        $region31: #{bidaf_output.3} parent=27 // pred_region
          %p246 = scmp.lt.s32.totalorder %s14, 1
          %s247 = scalar_select %p246, %s14, 1
          %s248 = smul.addr %s247, 3
          %s249 = smul.addr %s248, 8
          %s250 = scalar_lea.vmem %s0, %s249
        $region32: #{bidaf_output.3} parent=27 // pred_fallthru
          _
        // Predicated region
        $region33: #{bidaf_output.3} parent=27 // pred_check
          %p251 = pneg %p60
        $region34: #{bidaf_output.3} parent=27 // pred_check_branch
          %253 = sbr.rel (%p251) target = $region36
        $region35: #{bidaf_output.3} parent=27 // pred_region
          %p254 = scmp.lt.s32.totalorder %s14, 1
          %s255 = scalar_select %p254, %s14, 1
          %s256 = smul.addr %s255, 3
          %s257 = smul.addr %s256, 8
          %s258 = scalar_lea.vmem %s1, %s257
        $region36: #{bidaf_output.3} parent=27 // pred_fallthru
          _
        // Predicated region
        $region37: #{bidaf_output.3} parent=27 // pred_check
          %p259 = pneg %p86
        $region38: #{bidaf_output.3} parent=27 // pred_check_branch
          %261 = sbr.rel (%p259) target = $region40
        $region39: #{bidaf_output.3} parent=27 // pred_region
          %p262 = scmp.lt.s32.totalorder %s14, 1
          %s263 = scalar_select %p262, %s14, 1
          %s264 = smul.addr %s263, 3
          %s265 = smul.addr %s264, 8
          %s266 = scalar_lea.vmem %s2, %s265
        $region40: #{bidaf_output.3} parent=27 // pred_fallthru
          _
        // Predicated region
        $region41: #{bidaf_output.3} parent=27 // pred_check
          %p267 = pneg %p112
        $region42: #{bidaf_output.3} parent=27 // pred_check_branch
          %269 = sbr.rel (%p267) target = $region44
        $region43: #{bidaf_output.3} parent=27 // pred_region
          %p270 = scmp.lt.s32.totalorder %s14, 1
          %s271 = scalar_select %p270, %s14, 1
          %s272 = smul.addr %s271, 3
          %s273 = smul.addr %s272, 8
          %s274 = scalar_lea.vmem %s3, %s273
        $region44: #{bidaf_output.3} parent=27 // pred_fallthru
          _
      $region28: #{bidaf_output.3} parent=5 // pred_fallthru
        _
      %p275 = scmp.le.s32.totalorder 1, %s14
      %p276 = scmp.lt.s32.totalorder %s14, 3
      %p277 = pnand %p275, %p276
      %p278 = pneg %p277
      // Predicated region
      $region45: #{bidaf_output.3} parent=5 // pred_check
        _
      $region46: #{bidaf_output.3} parent=5 // pred_check_branch
        %280 = sbr.rel (%p277) target = $region48
      $region47: #{bidaf_output.3} parent=5 // pred_region
        %s281 = ssub.s32 %s14, 1
        // Predicated region
        $region49: #{bidaf_output.3} parent=47 // pred_check
          %p282 = pneg %p181
        $region50: #{bidaf_output.3} parent=47 // pred_check_branch
          %284 = sbr.rel (%p282) target = $region52
        $region51: #{bidaf_output.3} parent=47 // pred_region
          %285 = dma.done [#allocation3], 16
        $region52: #{bidaf_output.3} parent=47 // pred_fallthru
          _
        %286 = sfence
        %p287 = scmp.lt.s32.totalorder %s19, 1
        %s288 = scalar_select %p287, %s19, 1
        %s289 = smul.addr %s288, 3
        %s290 = smul.addr %s289, 8
        %s291 = scalar_lea.vmem %s0, %s290
        %p292 = pneg %p40
        %p293 = pneg %p37
        %p294 = scmp.lt.s32.totalorder %s19, 1
        %s295 = scalar_select %p294, %s19, 1
        %s296 = smul.addr %s295, 3
        %s297 = smul.addr %s296, 8
        %s298 = scalar_lea.vmem %s1, %s297
        %p299 = pneg %p66
        %p300 = pneg %p63
        %p301 = scmp.lt.s32.totalorder %s19, 1
        %s302 = scalar_select %p301, %s19, 1
        %s303 = smul.addr %s302, 3
        %s304 = smul.addr %s303, 8
        %s305 = scalar_lea.vmem %s2, %s304
        %p306 = pneg %p92
        %p307 = pneg %p89
        %p308 = scmp.lt.s32.totalorder %s19, 1
        %s309 = scalar_select %p308, %s19, 1
        %s310 = smul.addr %s309, 3
        %s311 = smul.addr %s310, 8
        %s312 = scalar_lea.vmem %s3, %s311
        %p313 = pneg %p118
        %p314 = pneg %p115
        %p315 = pneg %p139
        %p316 = pneg %p136
        %p317 = pneg %p160
        %p318 = pneg %p157
        %p319 = pneg %p181
        %p320 = pneg %p178
        %p321 = pneg %p207
        %p322 = pneg %p204
        %p323 = scmp.lt.s32.totalorder %s19, 1
        %s324 = scalar_select %p323, %s19, 1
        %s325 = smul.addr %s324, 3
        %s326 = smul.addr %s325, 8
        %s327 = scalar_lea.vmem %s7, %s326
        %p328 = scmp.lt.s32.totalorder %s19, 1
        %s329 = scalar_select %p328, %s19, 1
        %s330 = smul.addr %s329, 3
        %s331 = smul.addr %s330, 8
        %s332 = scalar_lea.vmem %s0, %s331
        %p333 = scmp.lt.s32.totalorder %s19, 1
        %s334 = scalar_select %p333, %s19, 1
        %s335 = smul.addr %s334, 3
        %s336 = smul.addr %s335, 8
        %s337 = scalar_lea.vmem %s1, %s336
        %p338 = scmp.lt.s32.totalorder %s19, 1
        %s339 = scalar_select %p338, %s19, 1
        %s340 = smul.addr %s339, 3
        %s341 = smul.addr %s340, 8
        %s342 = scalar_lea.vmem %s2, %s341
        %p343 = scmp.lt.s32.totalorder %s19, 1
        %s344 = scalar_select %p343, %s19, 1
        %s345 = smul.addr %s344, 3
        %s346 = smul.addr %s345, 8
        %s347 = scalar_lea.vmem %s3, %s346
        %p348 = scmp.lt.s32.totalorder %s19, 1
        %s349 = scalar_select %p348, %s19, 1
        %s350 = smul.addr %s349, 3
        %s351 = smul.addr %s350, 8
        %s352 = scalar_lea.vmem %s7, %s351
        %v353 = vld [vmem:[%s4] sm:$0xff]
        %v354 = vld [vmem:[%s4 + $0x8] sm:$0xff]
        %v355 = vld [vmem:[%s4 + $0x10] sm:$0xff]
        %v356 = vld [vmem:[%s4 + $0x18] sm:$0xff]
        %v357 = vld [vmem:[%s4 + $0x20] sm:$0xff]
        %v358 = vld [vmem:[%s4 + $0x28] sm:$0xff]
        %v359 = vld [vmem:[%s4 + $0x30] sm:$0xff]
        %v360 = vld [vmem:[%s4 + $0x38] sm:$0xff]
        %v361 = vld [vmem:[%s4 + $0x40] sm:$0xff]
        %v362 = vld [vmem:[%s4 + $0x48] sm:$0xff]
        %v363 = vld [vmem:[%s4 + $0x50] sm:$0xff]
        %v364 = vld [vmem:[%s4 + $0x58] sm:$0xff]
        %v365 = vld [vmem:[%s4 + $0x60] sm:$0xff]
        %v366 = vld [vmem:[%s4 + $0x68] sm:$0xff]
        %v367 = vld [vmem:[%s4 + $0x70] sm:$0xff]
        %v368 = vld [vmem:[%s4 + $0x78] sm:$0xff]
        %v369 = vld [vmem:[%s5] sm:$0xff]
        %v370 = vld [vmem:[%s5 + $0x8] sm:$0xff]
        %v371 = vld [vmem:[%s5 + $0x10] sm:$0xff]
        %v372 = vld [vmem:[%s5 + $0x18] sm:$0xff]
        %s373 = sld [smem:[#allocation2]]
        %s374 = sld [smem:[#allocation2 + $0x1]]
        %v375 = vld [vmem:[%s332] sm:$0xff]
        %v376 = vld [vmem:[%s332 + $0x8] sm:$0xff]
        %v377 = vld [vmem:[%s332 + $0x10] sm:$0xff]
        %v378 = vld [vmem:[%s337] sm:$0xff]
        %v379 = vld [vmem:[%s337 + $0x8] sm:$0xff]
        %v380 = vld [vmem:[%s337 + $0x10] sm:$0xff]
        %v381 = vld [vmem:[%s342] sm:$0xff]
        %v382 = vld [vmem:[%s342 + $0x8] sm:$0xff]
        %v383 = vld [vmem:[%s342 + $0x10] sm:$0xff]
        %v384 = vld [vmem:[%s347] sm:$0xff]
        %v385 = vld [vmem:[%s347 + $0x8] sm:$0xff]
        %v386 = vld [vmem:[%s347 + $0x10] sm:$0xff]
        %vm387 = vcmp.ne.f32.partialorder %v384, 0.0
        %vm388 = vcmp.ne.f32.partialorder %v385, 0.0
        %vm389 = vcmp.ne.f32.partialorder %v386, 0.0
        %390 = vmatprep.subr.mxu0 0.0
        %391 = vmatpush1.msra.mxu0 %v353
        %392 = vmatprep.subr.mxu0 0.0
        %393 = vmatpush1.msra.mxu0 %v354
        %394 = vmatprep.subr.mxu0 0.0
        %395 = vmatpush1.msra.mxu0 %v355
        %396 = vmatprep.subr.mxu0 0.0
        %397 = vmatpush1.msra.mxu0 %v356
        %398 = vmatprep.subr.mxu0 0.0
        %399 = vmatpush1.msra.mxu0 %v357
        %400 = vmatprep.subr.mxu0 0.0
        %401 = vmatpush1.msra.mxu0 %v358
        %402 = vmatprep.subr.mxu0 0.0
        %403 = vmatpush1.msra.mxu0 %v359
        %404 = vmatprep.subr.mxu0 0.0
        %405 = vmatpush1.msra.mxu0 %v360
        %406 = vmatprep.subr.mxu0 0.0
        %407 = vmatpush1.msra.mxu0 %v361
        %408 = vmatprep.subr.mxu0 0.0
        %409 = vmatpush1.msra.mxu0 %v362
        %410 = vmatprep.subr.mxu0 0.0
        %411 = vmatpush1.msra.mxu0 %v363
        %412 = vmatprep.subr.mxu0 0.0
        %413 = vmatpush1.msra.mxu0 %v364
        %414 = vmatprep.subr.mxu0 0.0
        %415 = vmatpush1.msra.mxu0 %v365
        %416 = vmatprep.subr.mxu0 0.0
        %417 = vmatpush1.msra.mxu0 %v366
        %418 = vmatprep.subr.mxu0 0.0
        %419 = vmatpush1.msra.mxu0 %v367
        %420 = vmatprep.subr.mxu0 0.0
        %421 = vmatpush1.msra.mxu0 %v368
        %422 = vmatprep.subr.mxu0 0.0
        %423 = vmatpush1.msra.mxu0 0.0
        %424 = vmatprep.subr.mxu0 0.0
        %425 = vmatpush1.msra.mxu0 0.0
        %426 = vmatprep.subr.mxu0 0.0
        %427 = vmatpush1.msra.mxu0 0.0
        %428 = vmatprep.subr.mxu0 0.0
        %429 = vmatpush1.msra.mxu0 0.0
        %430 = vmatprep.subr.mxu0 0.0
        %431 = vmatpush1.msra.mxu0 0.0
        %432 = vmatprep.subr.mxu0 0.0
        %433 = vmatpush1.msra.mxu0 0.0
        %434 = vmatprep.subr.mxu0 0.0
        %435 = vmatpush1.msra.mxu0 0.0
        %436 = vmatprep.subr.mxu0 0.0
        %437 = vmatpush1.msra.mxu0 0.0
        %438 = vmatprep.subr.mxu0 0.0
        %439 = vmatpush1.msra.mxu0 0.0
        %440 = vmatprep.subr.mxu0 0.0
        %441 = vmatpush1.msra.mxu0 0.0
        %442 = vmatprep.subr.mxu0 0.0
        %443 = vmatpush1.msra.mxu0 0.0
        %444 = vmatprep.subr.mxu0 0.0
        %445 = vmatpush1.msra.mxu0 0.0
        %446 = vmatprep.subr.mxu0 0.0
        %447 = vmatpush1.msra.mxu0 0.0
        %448 = vmatprep.subr.mxu0 0.0
        %449 = vmatpush1.msra.mxu0 0.0
        %450 = vmatprep.subr.mxu0 0.0
        %451 = vmatpush1.msra.mxu0 0.0
        %452 = vmatprep.subr.mxu0 0.0
        %453 = vmatpush1.msra.mxu0 0.0
        %454 = vmatprep.mubr.f32.mxu0 0.0
        %455 = vmatmul.mubr.f32.gmra.mrb[0].mxu0 %v375
        %v456 = vpop.f32.mrb[0].mxu0
        %v457 = vadd.f32 0.0, %v456
        %v458 = vpop.f32.mrb[0].mxu0
        %459 = vmatprep.mubr.f32.mxu0 0.0
        %460 = vmatmul.mubr.f32.gmra.mrb[0].mxu0 %v376
        %v461 = vpop.f32.mrb[0].mxu0
        %v462 = vadd.f32 0.0, %v461
        %v463 = vpop.f32.mrb[0].mxu0
        %464 = vmatprep.mubr.f32.mxu0 0.0
        %465 = vmatmul.mubr.f32.gmra.mrb[0].mxu0 %v377
        %v466 = vpop.f32.mrb[0].mxu0
        %v467 = vadd.f32 0.0, %v466
        %v468 = vpop.f32.mrb[0].mxu0
        %469 = vdwg.mxu0
        %vm470 = vcmask 261120
        %v472 = vsel %vm470, %v378, 0
        %v475 = vsel %vm470, %v379, 0
        %v478 = vsel %vm470, %v380, 0
        %480 = vmatprep.subr.mxu0 0.0
        %481 = vmatpush1.msra.mxu0 %v369
        %482 = vmatprep.subr.mxu0 0.0
        %483 = vmatpush1.msra.mxu0 %v370
        %484 = vmatprep.subr.mxu0 0.0
        %485 = vmatpush1.msra.mxu0 %v371
        %486 = vmatprep.subr.mxu0 0.0
        %487 = vmatpush1.msra.mxu0 %v372
        %488 = vmatprep.subr.mxu0 0.0
        %489 = vmatpush1.msra.mxu0 0.0
        %490 = vmatprep.subr.mxu0 0.0
        %491 = vmatpush1.msra.mxu0 0.0
        %492 = vmatprep.subr.mxu0 0.0
        %493 = vmatpush1.msra.mxu0 0.0
        %494 = vmatprep.subr.mxu0 0.0
        %495 = vmatpush1.msra.mxu0 0.0
        %496 = vmatprep.subr.mxu0 0.0
        %497 = vmatpush1.msra.mxu0 0.0
        %498 = vmatprep.subr.mxu0 0.0
        %499 = vmatpush1.msra.mxu0 0.0
        %500 = vmatprep.subr.mxu0 0.0
        %501 = vmatpush1.msra.mxu0 0.0
        %502 = vmatprep.subr.mxu0 0.0
        %503 = vmatpush1.msra.mxu0 0.0
        %504 = vmatprep.subr.mxu0 0.0
        %505 = vmatpush1.msra.mxu0 0.0
        %506 = vmatprep.subr.mxu0 0.0
        %507 = vmatpush1.msra.mxu0 0.0
        %508 = vmatprep.subr.mxu0 0.0
        %509 = vmatpush1.msra.mxu0 0.0
        %510 = vmatprep.subr.mxu0 0.0
        %511 = vmatpush1.msra.mxu0 0.0
        %512 = vmatprep.subr.mxu0 0.0
        %513 = vmatpush1.msra.mxu0 0.0
        %514 = vmatprep.subr.mxu0 0.0
        %515 = vmatpush1.msra.mxu0 0.0
        %516 = vmatprep.subr.mxu0 0.0
        %517 = vmatpush1.msra.mxu0 0.0
        %518 = vmatprep.subr.mxu0 0.0
        %519 = vmatpush1.msra.mxu0 0.0
        %520 = vmatprep.subr.mxu0 0.0
        %521 = vmatpush1.msra.mxu0 0.0
        %522 = vmatprep.subr.mxu0 0.0
        %523 = vmatpush1.msra.mxu0 0.0
        %524 = vmatprep.subr.mxu0 0.0
        %525 = vmatpush1.msra.mxu0 0.0
        %526 = vmatprep.subr.mxu0 0.0
        %527 = vmatpush1.msra.mxu0 0.0
        %528 = vmatprep.subr.mxu0 0.0
        %529 = vmatpush1.msra.mxu0 0.0
        %530 = vmatprep.subr.mxu0 0.0
        %531 = vmatpush1.msra.mxu0 0.0
        %532 = vmatprep.subr.mxu0 0.0
        %533 = vmatpush1.msra.mxu0 0.0
        %534 = vmatprep.subr.mxu0 0.0
        %535 = vmatpush1.msra.mxu0 0.0
        %536 = vmatprep.subr.mxu0 0.0
        %537 = vmatpush1.msra.mxu0 0.0
        %538 = vmatprep.subr.mxu0 0.0
        %539 = vmatpush1.msra.mxu0 0.0
        %540 = vmatprep.subr.mxu0 0.0
        %541 = vmatpush1.msra.mxu0 0.0
        %542 = vmatprep.subr.mxu0 0.0
        %543 = vmatpush1.msra.mxu0 0.0
        %544 = vmatprep.mubr.f32.mxu0 0.0
        %545 = vmatmul.mubr.f32.gmra.mrb[0].mxu0 %v472
        %v546 = vpop.f32.mrb[0].mxu0
        %v547 = vadd.f32 0.0, %v546
        %v548 = vpop.f32.mrb[0].mxu0
        %549 = vmatprep.mubr.f32.mxu0 0.0
        %550 = vmatmul.mubr.f32.gmra.mrb[0].mxu0 %v475
        %v551 = vpop.f32.mrb[0].mxu0
        %v552 = vadd.f32 0.0, %v551
        %v553 = vpop.f32.mrb[0].mxu0
        %554 = vmatprep.mubr.f32.mxu0 0.0
        %555 = vmatmul.mubr.f32.gmra.mrb[0].mxu0 %v478
        %v556 = vpop.f32.mrb[0].mxu0
        %v557 = vadd.f32 0.0, %v556
        %v558 = vpop.f32.mrb[0].mxu0
        %559 = vdwg.mxu0
        %v560 = vadd.f32 %v457, %v547
        %v561 = vadd.f32 %v462, %v552
        %v562 = vadd.f32 %v467, %v557
        %v563 = vstv %s373
        %v564 = vadd.f32 %v560, %v563
        %v565 = vadd.f32 %v561, %v563
        %v566 = vadd.f32 %v562, %v563
        %571 = vrot.lane.b32.xlu0 %v369, 127
        %v572 = vpop.permute.xlu0 %571
        %573 = vrot.lane.b32.xlu0 %v370, 127
        %v574 = vpop.permute.xlu0 %573
        %575 = vrot.lane.b32.xlu0 %v371, 127
        %v576 = vpop.permute.xlu0 %575
        %577 = vrot.lane.b32.xlu0 %v372, 127
        %v578 = vpop.permute.xlu0 %577
        %v584 = vsel %vm470, %v381, 0
        %v587 = vsel %vm470, %v382, 0
        %v590 = vsel %vm470, %v383, 0
        %592 = vmatprep.subr.mxu0 0.0
        %593 = vmatpush1.msra.mxu0 %v572
        %594 = vmatprep.subr.mxu0 0.0
        %595 = vmatpush1.msra.mxu0 %v574
        %596 = vmatprep.subr.mxu0 0.0
        %597 = vmatpush1.msra.mxu0 %v576
        %598 = vmatprep.subr.mxu0 0.0
        %599 = vmatpush1.msra.mxu0 %v578
        %600 = vmatprep.subr.mxu0 0.0
        %601 = vmatpush1.msra.mxu0 0.0
        %602 = vmatprep.subr.mxu0 0.0
        %603 = vmatpush1.msra.mxu0 0.0
        %604 = vmatprep.subr.mxu0 0.0
        %605 = vmatpush1.msra.mxu0 0.0
        %606 = vmatprep.subr.mxu0 0.0
        %607 = vmatpush1.msra.mxu0 0.0
        %608 = vmatprep.subr.mxu0 0.0
        %609 = vmatpush1.msra.mxu0 0.0
        %610 = vmatprep.subr.mxu0 0.0
        %611 = vmatpush1.msra.mxu0 0.0
        %612 = vmatprep.subr.mxu0 0.0
        %613 = vmatpush1.msra.mxu0 0.0
        %614 = vmatprep.subr.mxu0 0.0
        %615 = vmatpush1.msra.mxu0 0.0
        %616 = vmatprep.subr.mxu0 0.0
        %617 = vmatpush1.msra.mxu0 0.0
        %618 = vmatprep.subr.mxu0 0.0
        %619 = vmatpush1.msra.mxu0 0.0
        %620 = vmatprep.subr.mxu0 0.0
        %621 = vmatpush1.msra.mxu0 0.0
        %622 = vmatprep.subr.mxu0 0.0
        %623 = vmatpush1.msra.mxu0 0.0
        %624 = vmatprep.subr.mxu0 0.0
        %625 = vmatpush1.msra.mxu0 0.0
        %626 = vmatprep.subr.mxu0 0.0
        %627 = vmatpush1.msra.mxu0 0.0
        %628 = vmatprep.subr.mxu0 0.0
        %629 = vmatpush1.msra.mxu0 0.0
        %630 = vmatprep.subr.mxu0 0.0
        %631 = vmatpush1.msra.mxu0 0.0
        %632 = vmatprep.subr.mxu0 0.0
        %633 = vmatpush1.msra.mxu0 0.0
        %634 = vmatprep.subr.mxu0 0.0
        %635 = vmatpush1.msra.mxu0 0.0
        %636 = vmatprep.subr.mxu0 0.0
        %637 = vmatpush1.msra.mxu0 0.0
        %638 = vmatprep.subr.mxu0 0.0
        %639 = vmatpush1.msra.mxu0 0.0
        %640 = vmatprep.subr.mxu0 0.0
        %641 = vmatpush1.msra.mxu0 0.0
        %642 = vmatprep.subr.mxu0 0.0
        %643 = vmatpush1.msra.mxu0 0.0
        %644 = vmatprep.subr.mxu0 0.0
        %645 = vmatpush1.msra.mxu0 0.0
        %646 = vmatprep.subr.mxu0 0.0
        %647 = vmatpush1.msra.mxu0 0.0
        %648 = vmatprep.subr.mxu0 0.0
        %649 = vmatpush1.msra.mxu0 0.0
        %650 = vmatprep.subr.mxu0 0.0
        %651 = vmatpush1.msra.mxu0 0.0
        %652 = vmatprep.subr.mxu0 0.0
        %653 = vmatpush1.msra.mxu0 0.0
        %654 = vmatprep.subr.mxu0 0.0
        %655 = vmatpush1.msra.mxu0 0.0
        %656 = vmatprep.mubr.f32.mxu0 0.0
        %657 = vmatmul.mubr.f32.gmra.mrb[0].mxu0 %v584
        %v658 = vpop.f32.mrb[0].mxu0
        %v659 = vadd.f32 0.0, %v658
        %v660 = vpop.f32.mrb[0].mxu0
        %661 = vmatprep.mubr.f32.mxu0 0.0
        %662 = vmatmul.mubr.f32.gmra.mrb[0].mxu0 %v587
        %v663 = vpop.f32.mrb[0].mxu0
        %v664 = vadd.f32 0.0, %v663
        %v665 = vpop.f32.mrb[0].mxu0
        %666 = vmatprep.mubr.f32.mxu0 0.0
        %667 = vmatmul.mubr.f32.gmra.mrb[0].mxu0 %v590
        %v668 = vpop.f32.mrb[0].mxu0
        %v669 = vadd.f32 0.0, %v668
        %v670 = vpop.f32.mrb[0].mxu0
        %671 = vdwg.mxu0
        %675 = vrot.lane.b32.xlu0 %v659, 1
        %v676 = vpop.permute.xlu0 %675
        %677 = vrot.lane.b32.xlu0 %v664, 1
        %v678 = vpop.permute.xlu0 %677
        %679 = vrot.lane.b32.xlu0 %v669, 1
        %v680 = vpop.permute.xlu0 %679
        %v684 = vadd.f32 %v457, %v676
        %v685 = vadd.f32 %v462, %v678
        %v686 = vadd.f32 %v467, %v680
        %v687 = vstv %s374
        %v688 = vadd.f32 %v684, %v687
        %v689 = vadd.f32 %v685, %v687
        %v690 = vadd.f32 %v686, %v687
        %v691 = vsel %vm387, %v564, -1e+30
        %v692 = vsel %vm388, %v565, -1e+30
        %v693 = vsel %vm389, %v566, -1e+30
        %vm694 = vcmask 7168
        %v695 = vsel %vm694, %v691, -inf
        %v696 = vsel %vm694, %v692, -inf
        %v697 = vsel %vm694, %v693, -inf
        %v698 = vmax.f32 %v695, %v696
        %v699 = vmax.f32 %v698, %v697
        %v700 = vrot.slane %v699, 4
        %v701 = vmax.f32 %v699, %v700
        %v702 = vrot.slane %v701, 2
        %v703 = vmax.f32 %v701, %v702
        %v704 = vrot.slane %v703, 1
        %v705 = vmax.f32 %v703, %v704
        %v706 = vsub.f32 %v691, %v705
        %v707 = vsub.f32 %v692, %v705
        %v708 = vsub.f32 %v693, %v705
        %v709 = vmul.f32 %v706, 1.442695
        %v710 = vpow.pop %v709
        %v711 = vmul.f32 %v707, 1.442695
        %v712 = vpow.pop %v711
        %v713 = vmul.f32 %v708, 1.442695
        %v714 = vpow.pop %v713
        %v715 = vsel %vm694, %v710, 0.0
        %v716 = vsel %vm694, %v712, 0.0
        %v717 = vadd.f32 %v715, %v716
        %v718 = vsel %vm694, %v714, 0.0
        %v719 = vadd.f32 %v717, %v718
        %v720 = vrot.slane %v719, 4
        %v721 = vadd.f32 %v719, %v720
        %v722 = vrot.slane %v721, 2
        %v723 = vadd.f32 %v721, %v722
        %v724 = vrot.slane %v723, 1
        %v725 = vadd.f32 %v723, %v724
        %v726 = vlog2.pop %v725
        %v727 = vmul.f32 %v726, 0.6931472
        %v728 = vsub.f32 %v706, %v727
        %v729 = vsub.f32 %v707, %v727
        %v730 = vsub.f32 %v708, %v727
        %731 = vst.msk [vmem:[%s352] sm:$0xff] %vm694, %v728
        %732 = vst.msk [vmem:[%s352 + $0x8] sm:$0xff] %vm694, %v729
        %733 = vst.msk [vmem:[%s352 + $0x10] sm:$0xff] %vm694, %v730
        %737 = vrot.lane.b32.xlu0 %v688, 127
        %v738 = vpop.permute.xlu0 %737
        %739 = vrot.lane.b32.xlu0 %v689, 127
        %v740 = vpop.permute.xlu0 %739
        %741 = vrot.lane.b32.xlu0 %v690, 127
        %v742 = vpop.permute.xlu0 %741
        %v746 = vsel %vm387, %v738, -1e+30
        %v747 = vsel %vm388, %v740, -1e+30
        %v748 = vsel %vm389, %v742, -1e+30
        %v749 = vsel %vm694, %v746, -inf
        %v750 = vsel %vm694, %v747, -inf
        %v751 = vsel %vm694, %v748, -inf
        %v752 = vmax.f32 %v749, %v750
        %v753 = vmax.f32 %v752, %v751
        %v754 = vrot.slane %v753, 4
        %v755 = vmax.f32 %v753, %v754
        %v756 = vrot.slane %v755, 2
        %v757 = vmax.f32 %v755, %v756
        %v758 = vrot.slane %v757, 1
        %v759 = vmax.f32 %v757, %v758
        %v760 = vsub.f32 %v746, %v759
        %v761 = vsub.f32 %v747, %v759
        %v762 = vsub.f32 %v748, %v759
        %v763 = vmul.f32 %v760, 1.442695
        %v764 = vpow.pop %v763
        %v765 = vmul.f32 %v761, 1.442695
        %v766 = vpow.pop %v765
        %v767 = vmul.f32 %v762, 1.442695
        %v768 = vpow.pop %v767
        %v769 = vsel %vm694, %v764, 0.0
        %v770 = vsel %vm694, %v766, 0.0
        %v771 = vadd.f32 %v769, %v770
        %v772 = vsel %vm694, %v768, 0.0
        %v773 = vadd.f32 %v771, %v772
        %v774 = vrot.slane %v773, 4
        %v775 = vadd.f32 %v773, %v774
        %v776 = vrot.slane %v775, 2
        %v777 = vadd.f32 %v775, %v776
        %v778 = vrot.slane %v777, 1
        %v779 = vadd.f32 %v777, %v778
        %v780 = vlog2.pop %v779
        %v781 = vmul.f32 %v780, 0.6931472
        %v782 = vsub.f32 %v760, %v781
        %v783 = vsub.f32 %v761, %v781
        %v784 = vsub.f32 %v762, %v781
        %788 = vrot.lane.b32.xlu0 %v782, 1
        %v789 = vpop.permute.xlu0 %788
        %790 = vrot.lane.b32.xlu0 %v783, 1
        %v791 = vpop.permute.xlu0 %790
        %792 = vrot.lane.b32.xlu0 %v784, 1
        %v793 = vpop.permute.xlu0 %792
        %vm797 = vcmask 15368
        %798 = vst.msk [vmem:[%s352] sm:$0xff] %vm797, %v789
        %799 = vst.msk [vmem:[%s352 + $0x8] sm:$0xff] %vm797, %v791
        %800 = vst.msk [vmem:[%s352 + $0x10] sm:$0xff] %vm797, %v793
        %p801 = scmp.lt.s32.totalorder %s19, 1
        %s802 = scalar_select %p801, %s19, 1
        %s803 = smul.addr %s802, 3
        %s804 = smul.addr %s803, 8
        %s805 = scalar_lea.vmem %s7, %s804
        // Predicated region
        $region53: #{bidaf_output.3} parent=47 // pred_check
          %p806 = pneg %p204
        $region54: #{bidaf_output.3} parent=47 // pred_check_branch
          %808 = sbr.rel (%p806) target = $region56
        $region55: #{bidaf_output.3} parent=47 // pred_region
          _
        $region56: #{bidaf_output.3} parent=47 // pred_fallthru
          _
      $region48: #{bidaf_output.3} parent=5 // pred_fallthru
        _
      %p809 = scmp.le.s32.totalorder 2, %s14
      // Predicated region
      $region57: #{bidaf_output.3} parent=5 // pred_check
        %p810 = pneg %p809
      $region58: #{bidaf_output.3} parent=5 // pred_check_branch
        %812 = sbr.rel (%p810) target = $region60
      $region59: #{bidaf_output.3} parent=5 // pred_region
        %s813 = ssub.s32 %s14, 2
        // Predicated region
        $region61: #{bidaf_output.3} parent=59 // pred_check
          %p814 = pneg %p210
        $region62: #{bidaf_output.3} parent=59 // pred_check_branch
          %816 = sbr.rel (%p814) target = $region64
        $region63: #{bidaf_output.3} parent=59 // pred_region
          %p817 = scmp.lt.s32.totalorder %s20, 1
          %s818 = scalar_select %p817, %s20, 1
          %s819 = smul.addr %s818, 3
          %s820 = smul.addr %s819, 8
          %s821 = scalar_lea.vmem %s7, %s820
        $region64: #{bidaf_output.3} parent=59 // pred_fallthru
          _
      $region60: #{bidaf_output.3} parent=5 // pred_fallthru
        _
    $region6: #{bidaf_output.3} parent=1 // loop_footer
      %s18 = sadd.s32 1, %s14
    $region7: #{bidaf_output.3} parent=1 // loop_footer_branch
      %13 = sbr.rel target = $region3
    $region8: #{bidaf_output.3} parent=1 // loop_exit
      _
    %822 = vsyncpa [#allocation3], 1
    %s823 = scalar_lea.sflag [#allocation3], 1
    %824 = vsyncpa %s823, 1

// kernel: bidaf_output.2
$region0: #{bidaf_output.2}
  #allocation0 [shape = 'u32[]', space=smem, size = 0x4, offset = 0x4, fixed_abs, tag = 'smem constant byte address 0x4 - core index']
  #allocation1 [shape = 'u32[144,128]{1,0:T(1,128)}', space=vmem, size = 0x12000, scoped, tag = 'internal scratch']
  #allocation2 [shape = 'f32[24,64]{1,0:T(8,128)}', space=vmem, size = 0x3000, scoped, tag = 'scratch operand']
  #allocation3 [shape = 'f32[1,16]{1,0:T(1,128)}', space=vmem, size = 0x200, scoped, tag = 'scratch operand']
  #allocation4 [shape = 'f32[1,16]{1,0:T(1,128)}', space=vmem, size = 0x200, scoped, tag = 'scratch operand']
  #allocation5 [shape = 's32[1]{0}', space=sflag, size = 0x4, scoped, tag = 'scoped memory for bidaf_output.2']
  #allocation6 [shape = 'u8[512]{0}', space=smem, size = 0x200, scoped, tag = 'prefetched SMEM operand 0']
  %s0 = inlined_call_operand.vmem [shape: s32[2], index: 0, kind: input, shape index: {}]
  %s1 = inlined_call_operand.vmem [shape: f32[2,24,32], index: 1, kind: input, shape index: {}]
  %s2 = inlined_call_operand.vmem [shape: f32[32,64], index: 2, kind: input, shape index: {}]
  %s3 = inlined_call_operand.vmem [shape: f32[16,64], index: 3, kind: input, shape index: {}]
  %s4 = inlined_call_operand.vmem [shape: f32[1,64], index: 4, kind: input, shape index: {}]
  %s5 = inlined_call_operand.vmem [shape: f32[32,64], index: 5, kind: input, shape index: {}]
  %s6 = inlined_call_operand.vmem [shape: f32[16,64], index: 6, kind: input, shape index: {}]
  %s7 = inlined_call_operand.vmem [shape: f32[1,64], index: 7, kind: input, shape index: {}]
  %s8 = inlined_call_operand.vmem [shape: f32[2,24,32], index: 8, kind: output, shape index: {}]
  %s9 = sld [smem:[#allocation0]]
  $region75: #{bidaf_output.2} parent=0
    _
  %s11 = ssub.s32 1, %s9
  %s12 = scalar_select 0, %s11, %s9
  %s13 = sshll.u32 %s0, 4
  %s14 = int_to_ptr.vmem [resolvable:$true] %s13
  %16 = dma.vmem_to_smem %s14, 16, [#allocation6], [#allocation5]
  %17 = dma.done [#allocation5], 16
  %18 = sfence
  loop: start=0, step=1, limit=4
  $region2: #{bidaf_output.2} parent=0 // loop_pre_header
    _
  $region3: #{bidaf_output.2} parent=0 // loop_header
    %s20 = sphi 0, %s24
    %p21 = scmp.ge.s32.totalorder %s20, 4
    %s30 = sphi 0, %s32
    %s33 = sphi 0, %s30
    %s34 = sphi 0, %s33
    %s50 = sphi 0, %s34
    %s54 = sphi 0, %s54
    %s56 = sphi 0, %s54
    %s57 = sphi 0, %s56
    %s71 = sphi 0, %s57
    %s75 = sphi 0, %s75
    %s77 = sphi 0, %s75
    %s78 = sphi 0, %s77
    %s92 = sphi 0, %s78
    %s96 = sphi 0, %s96
    %s98 = sphi 0, %s96
    %s99 = sphi 0, %s98
    %s113 = sphi 0, %s99
    %s117 = sphi 0, %s117
    %s119 = sphi 0, %s117
    %s120 = sphi 0, %s119
    %s134 = sphi 0, %s120
    %s138 = sphi 0, %s138
    %s140 = sphi 0, %s138
    %s141 = sphi 0, %s140
    %s155 = sphi 0, %s141
    %s159 = sphi 0, %s159
    %s161 = sphi 0, %s159
    %s162 = sphi 0, %s161
    %s176 = sphi 0, %s162
    %s182 = sphi 0, %s184
    %s185 = sphi 0, %s182
    %s186 = sphi 0, %s185
    %s202 = sphi 0, %s186
  $region4: #{bidaf_output.2} parent=0 // loop_header_branch
    %23 = sbr.rel (%p21) target = $region8
  $region5: #{bidaf_output.2} parent=0 // loop_body
    %s25 = ssub.s32 %s20, 1
    %s26 = ssub.s32 %s20, 2
    %s27 = sadd.s32 %s20, 1
    %s28 = ssub.s32 %s20, %s27
    %p29 = scmp.eq.s32.totalorder %s28, 0
    %s31 = sadd.s32 %s30, 1
    %s32 = scalar_select %p29, %s30, %s31
    %p35 = pneg %p29
    %p36 = scmp.eq.s32.totalorder %s20, 1
    %p37 = por %p35, %p36
    %p38 = scmp.ne.s32.totalorder %s30, %s33
    %p39 = scmp.eq.s32.totalorder %s20, 0
    %p40 = por %p38, %p39
    %p41 = scmp.ne.s32.totalorder %s30, %s33
    %p42 = scmp.eq.s32.totalorder %s25, 1
    %p43 = por %p41, %p42
    %p44 = scmp.ne.s32.totalorder %s33, %s34
    %p45 = scmp.eq.s32.totalorder %s25, 0
    %p46 = por %p44, %p45
    %p47 = scmp.ne.s32.totalorder %s33, %s34
    %p48 = scmp.eq.s32.totalorder %s26, 1
    %p49 = por %p47, %p48
    %p51 = scmp.ne.s32.totalorder %s34, %s50
    %p52 = scmp.eq.s32.totalorder %s26, 0
    %p53 = por %p51, %p52
    %s55 = sadd.s32 %s54, 1
    %p58 = scmp.eq.s32.totalorder %s20, 1
    %p59 = scmp.ne.s32.totalorder %s54, %s56
    %p60 = scmp.eq.s32.totalorder %s20, 0
    %p61 = por %p59, %p60
    %p62 = scmp.ne.s32.totalorder %s54, %s56
    %p63 = scmp.eq.s32.totalorder %s25, 1
    %p64 = por %p62, %p63
    %p65 = scmp.ne.s32.totalorder %s56, %s57
    %p66 = scmp.eq.s32.totalorder %s25, 0
    %p67 = por %p65, %p66
    %p68 = scmp.ne.s32.totalorder %s56, %s57
    %p69 = scmp.eq.s32.totalorder %s26, 1
    %p70 = por %p68, %p69
    %p72 = scmp.ne.s32.totalorder %s57, %s71
    %p73 = scmp.eq.s32.totalorder %s26, 0
    %p74 = por %p72, %p73
    %s76 = sadd.s32 %s75, 1
    %p79 = scmp.eq.s32.totalorder %s20, 1
    %p80 = scmp.ne.s32.totalorder %s75, %s77
    %p81 = scmp.eq.s32.totalorder %s20, 0
    %p82 = por %p80, %p81
    %p83 = scmp.ne.s32.totalorder %s75, %s77
    %p84 = scmp.eq.s32.totalorder %s25, 1
    %p85 = por %p83, %p84
    %p86 = scmp.ne.s32.totalorder %s77, %s78
    %p87 = scmp.eq.s32.totalorder %s25, 0
    %p88 = por %p86, %p87
    %p89 = scmp.ne.s32.totalorder %s77, %s78
    %p90 = scmp.eq.s32.totalorder %s26, 1
    %p91 = por %p89, %p90
    %p93 = scmp.ne.s32.totalorder %s78, %s92
    %p94 = scmp.eq.s32.totalorder %s26, 0
    %p95 = por %p93, %p94
    %s97 = sadd.s32 %s96, 1
    %p100 = scmp.eq.s32.totalorder %s20, 1
    %p101 = scmp.ne.s32.totalorder %s96, %s98
    %p102 = scmp.eq.s32.totalorder %s20, 0
    %p103 = por %p101, %p102
    %p104 = scmp.ne.s32.totalorder %s96, %s98
    %p105 = scmp.eq.s32.totalorder %s25, 1
    %p106 = por %p104, %p105
    %p107 = scmp.ne.s32.totalorder %s98, %s99
    %p108 = scmp.eq.s32.totalorder %s25, 0
    %p109 = por %p107, %p108
    %p110 = scmp.ne.s32.totalorder %s98, %s99
    %p111 = scmp.eq.s32.totalorder %s26, 1
    %p112 = por %p110, %p111
    %p114 = scmp.ne.s32.totalorder %s99, %s113
    %p115 = scmp.eq.s32.totalorder %s26, 0
    %p116 = por %p114, %p115
    %s118 = sadd.s32 %s117, 1
    %p121 = scmp.eq.s32.totalorder %s20, 1
    %p122 = scmp.ne.s32.totalorder %s117, %s119
    %p123 = scmp.eq.s32.totalorder %s20, 0
    %p124 = por %p122, %p123
    %p125 = scmp.ne.s32.totalorder %s117, %s119
    %p126 = scmp.eq.s32.totalorder %s25, 1
    %p127 = por %p125, %p126
    %p128 = scmp.ne.s32.totalorder %s119, %s120
    %p129 = scmp.eq.s32.totalorder %s25, 0
    %p130 = por %p128, %p129
    %p131 = scmp.ne.s32.totalorder %s119, %s120
    %p132 = scmp.eq.s32.totalorder %s26, 1
    %p133 = por %p131, %p132
    %p135 = scmp.ne.s32.totalorder %s120, %s134
    %p136 = scmp.eq.s32.totalorder %s26, 0
    %p137 = por %p135, %p136
    %s139 = sadd.s32 %s138, 1
    %p142 = scmp.eq.s32.totalorder %s20, 1
    %p143 = scmp.ne.s32.totalorder %s138, %s140
    %p144 = scmp.eq.s32.totalorder %s20, 0
    %p145 = por %p143, %p144
    %p146 = scmp.ne.s32.totalorder %s138, %s140
    %p147 = scmp.eq.s32.totalorder %s25, 1
    %p148 = por %p146, %p147
    %p149 = scmp.ne.s32.totalorder %s140, %s141
    %p150 = scmp.eq.s32.totalorder %s25, 0
    %p151 = por %p149, %p150
    %p152 = scmp.ne.s32.totalorder %s140, %s141
    %p153 = scmp.eq.s32.totalorder %s26, 1
    %p154 = por %p152, %p153
    %p156 = scmp.ne.s32.totalorder %s141, %s155
    %p157 = scmp.eq.s32.totalorder %s26, 0
    %p158 = por %p156, %p157
    %s160 = sadd.s32 %s159, 1
    %p163 = scmp.eq.s32.totalorder %s20, 1
    %p164 = scmp.ne.s32.totalorder %s159, %s161
    %p165 = scmp.eq.s32.totalorder %s20, 0
    %p166 = por %p164, %p165
    %p167 = scmp.ne.s32.totalorder %s159, %s161
    %p168 = scmp.eq.s32.totalorder %s25, 1
    %p169 = por %p167, %p168
    %p170 = scmp.ne.s32.totalorder %s161, %s162
    %p171 = scmp.eq.s32.totalorder %s25, 0
    %p172 = por %p170, %p171
    %p173 = scmp.ne.s32.totalorder %s161, %s162
    %p174 = scmp.eq.s32.totalorder %s26, 1
    %p175 = por %p173, %p174
    %p177 = scmp.ne.s32.totalorder %s162, %s176
    %p178 = scmp.eq.s32.totalorder %s26, 0
    %p179 = por %p177, %p178
    %s180 = ssub.s32 %s20, %s27
    %p181 = scmp.eq.s32.totalorder %s180, 0
    %s183 = sadd.s32 %s182, 1
    %s184 = scalar_select %p181, %s182, %s183
    %p187 = pneg %p181
    %p188 = scmp.eq.s32.totalorder %s20, 1
    %p189 = por %p187, %p188
    %p190 = scmp.ne.s32.totalorder %s182, %s185
    %p191 = scmp.eq.s32.totalorder %s20, 0
    %p192 = por %p190, %p191
    %p193 = scmp.ne.s32.totalorder %s182, %s185
    %p194 = scmp.eq.s32.totalorder %s25, 1
    %p195 = por %p193, %p194
    %p196 = scmp.ne.s32.totalorder %s185, %s186
    %p197 = scmp.eq.s32.totalorder %s25, 0
    %p198 = por %p196, %p197
    %p199 = scmp.ne.s32.totalorder %s185, %s186
    %p200 = scmp.eq.s32.totalorder %s26, 1
    %p201 = por %p199, %p200
    %p203 = scmp.ne.s32.totalorder %s186, %s202
    %p204 = scmp.eq.s32.totalorder %s26, 0
    %p205 = por %p203, %p204
    %p206 = scmp.le.s32.totalorder 1, %s20
    %p207 = scmp.lt.s32.totalorder %s20, 3
    %p208 = pnand %p206, %p207
    %p209 = pneg %p208
    // Predicated region
    $region9: #{bidaf_output.2} parent=5 // pred_check
      _
    $region10: #{bidaf_output.2} parent=5 // pred_check_branch
      %211 = sbr.rel (%p208) target = $region12
    $region11: #{bidaf_output.2} parent=5 // pred_region
      %s212 = ssub.s32 %s20, 1
      // Predicated region
      $region13: #{bidaf_output.2} parent=11 // pred_check
        %p213 = pneg %p67
      $region14: #{bidaf_output.2} parent=11 // pred_check_branch
        %215 = sbr.rel (%p213) target = $region16
      $region15: #{bidaf_output.2} parent=11 // pred_region
        _
      $region16: #{bidaf_output.2} parent=11 // pred_fallthru
        _
      // Predicated region
      $region17: #{bidaf_output.2} parent=11 // pred_check
        %p216 = pneg %p88
      $region18: #{bidaf_output.2} parent=11 // pred_check_branch
        %218 = sbr.rel (%p216) target = $region20
      $region19: #{bidaf_output.2} parent=11 // pred_region
        _
      $region20: #{bidaf_output.2} parent=11 // pred_fallthru
        _
      // Predicated region
      $region21: #{bidaf_output.2} parent=11 // pred_check
        %p219 = pneg %p109
      $region22: #{bidaf_output.2} parent=11 // pred_check_branch
        %221 = sbr.rel (%p219) target = $region24
      $region23: #{bidaf_output.2} parent=11 // pred_region
        _
      $region24: #{bidaf_output.2} parent=11 // pred_fallthru
        _
      // Predicated region
      $region25: #{bidaf_output.2} parent=11 // pred_check
        %p222 = pneg %p130
      $region26: #{bidaf_output.2} parent=11 // pred_check_branch
        %224 = sbr.rel (%p222) target = $region28
      $region27: #{bidaf_output.2} parent=11 // pred_region
        _
      $region28: #{bidaf_output.2} parent=11 // pred_fallthru
        _
      // Predicated region
      $region29: #{bidaf_output.2} parent=11 // pred_check
        %p225 = pneg %p151
      $region30: #{bidaf_output.2} parent=11 // pred_check_branch
        %227 = sbr.rel (%p225) target = $region32
      $region31: #{bidaf_output.2} parent=11 // pred_region
        _
      $region32: #{bidaf_output.2} parent=11 // pred_fallthru
        _
      // Predicated region
      $region33: #{bidaf_output.2} parent=11 // pred_check
        %p228 = pneg %p172
      $region34: #{bidaf_output.2} parent=11 // pred_check_branch
        %230 = sbr.rel (%p228) target = $region36
      $region35: #{bidaf_output.2} parent=11 // pred_region
        _
      $region36: #{bidaf_output.2} parent=11 // pred_fallthru
        _
    $region12: #{bidaf_output.2} parent=5 // pred_fallthru
      _
    %p231 = scmp.lt.s32.totalorder %s20, 2
    // Predicated region
    $region37: #{bidaf_output.2} parent=5 // pred_check
      %p232 = pneg %p231
    $region38: #{bidaf_output.2} parent=5 // pred_check_branch
      %234 = sbr.rel (%p232) target = $region40
    $region39: #{bidaf_output.2} parent=5 // pred_region
      // Predicated region
      $region41: #{bidaf_output.2} parent=39 // pred_check
        %p235 = pneg %p40
      $region42: #{bidaf_output.2} parent=39 // pred_check_branch
        %237 = sbr.rel (%p235) target = $region44
      $region43: #{bidaf_output.2} parent=39 // pred_region
        %p238 = scmp.lt.s32.totalorder %s20, 1
        %s239 = scalar_select %p238, %s20, 1
        %s240 = smul.addr %s239, 3
        %s241 = smul.addr %s240, 8
        %s242 = scalar_lea.vmem %s1, %s241
      $region44: #{bidaf_output.2} parent=39 // pred_fallthru
        _
    $region40: #{bidaf_output.2} parent=5 // pred_fallthru
      _
    %p243 = scmp.le.s32.totalorder 1, %s20
    %p244 = scmp.lt.s32.totalorder %s20, 3
    %p245 = pnand %p243, %p244
    %p246 = pneg %p245
    // Predicated region
    $region45: #{bidaf_output.2} parent=5 // pred_check
      _
    $region46: #{bidaf_output.2} parent=5 // pred_check_branch
      %248 = sbr.rel (%p245) target = $region48
    $region47: #{bidaf_output.2} parent=5 // pred_region
      %s249 = ssub.s32 %s20, 1
      %p250 = scmp.lt.s32.totalorder %s25, 1
      %s251 = scalar_select %p250, %s25, 1
      %s252 = smul.addr %s251, 3
      %s253 = smul.addr %s252, 8
      %s254 = scalar_lea.vmem %s1, %s253
      %p255 = pneg %p46
      %p256 = pneg %p43
      %p257 = pneg %p67
      %p258 = pneg %p64
      %p259 = pneg %p88
      %p260 = pneg %p85
      %p261 = pneg %p109
      %p262 = pneg %p106
      %p263 = pneg %p130
      %p264 = pneg %p127
      %p265 = pneg %p151
      %p266 = pneg %p148
      %p267 = pneg %p172
      %p268 = pneg %p169
      %p269 = pneg %p198
      %p270 = pneg %p195
      %p271 = scmp.lt.s32.totalorder %s25, 1
      %s272 = scalar_select %p271, %s25, 1
      %s273 = smul.addr %s272, 3
      %s274 = smul.addr %s273, 8
      %s275 = scalar_lea.vmem %s8, %s274
      %p276 = scmp.lt.s32.totalorder %s25, 1
      %s277 = scalar_select %p276, %s25, 1
      %s278 = smul.addr %s277, 3
      %s279 = smul.addr %s278, 8
      %s280 = scalar_lea.vmem %s1, %s279
      %p281 = scmp.lt.s32.totalorder %s25, 1
      %s282 = scalar_select %p281, %s25, 1
      %s283 = smul.addr %s282, 3
      %s284 = smul.addr %s283, 8
      %s285 = scalar_lea.vmem %s8, %s284
      %s286 = sld [smem:[#allocation6 + %s25]]
      %v287 = vld [vmem:[%s280] sm:$0xff]
      %v288 = vld [vmem:[%s280 + $0x8] sm:$0xff]
      %v289 = vld [vmem:[%s280 + $0x10] sm:$0xff]
      %v290 = vld [vmem:[%s2] sm:$0xff]
      %v291 = vld [vmem:[%s2 + $0x8] sm:$0xff]
      %v292 = vld [vmem:[%s2 + $0x10] sm:$0xff]
      %v293 = vld [vmem:[%s2 + $0x18] sm:$0xff]
      %v294 = vld [vmem:[%s4] sm:$0x1]
      %v296 = vlaneseq
      %v297 = vshrl.u32 %v296, 7
      %v298 = vsub.s32 0, %v297
      %v299 = vrot.slane %v294, %v298
      %vm301 = vcmask 261120
      %v303 = vsel %vm301, %v287, 0
      %v306 = vsel %vm301, %v288, 0
      %v309 = vsel %vm301, %v289, 0
      %311 = vmatprep.subr.mxu0 0.0
      %312 = vmatpush1.msra.mxu0 %v290
      %313 = vmatprep.subr.mxu0 0.0
      %314 = vmatpush1.msra.mxu0 %v291
      %315 = vmatprep.subr.mxu0 0.0
      %316 = vmatpush1.msra.mxu0 %v292
      %317 = vmatprep.subr.mxu0 0.0
      %318 = vmatpush1.msra.mxu0 %v293
      %319 = vmatprep.subr.mxu0 0.0
      %320 = vmatpush1.msra.mxu0 0.0
      %321 = vmatprep.subr.mxu0 0.0
      %322 = vmatpush1.msra.mxu0 0.0
      %323 = vmatprep.subr.mxu0 0.0
      %324 = vmatpush1.msra.mxu0 0.0
      %325 = vmatprep.subr.mxu0 0.0
      %326 = vmatpush1.msra.mxu0 0.0
      %327 = vmatprep.subr.mxu0 0.0
      %328 = vmatpush1.msra.mxu0 0.0
      %329 = vmatprep.subr.mxu0 0.0
      %330 = vmatpush1.msra.mxu0 0.0
      %331 = vmatprep.subr.mxu0 0.0
      %332 = vmatpush1.msra.mxu0 0.0
      %333 = vmatprep.subr.mxu0 0.0
      %334 = vmatpush1.msra.mxu0 0.0
      %335 = vmatprep.subr.mxu0 0.0
      %336 = vmatpush1.msra.mxu0 0.0
      %337 = vmatprep.subr.mxu0 0.0
      %338 = vmatpush1.msra.mxu0 0.0
      %339 = vmatprep.subr.mxu0 0.0
      %340 = vmatpush1.msra.mxu0 0.0
      %341 = vmatprep.subr.mxu0 0.0
      %342 = vmatpush1.msra.mxu0 0.0
      %343 = vmatprep.subr.mxu0 0.0
      %344 = vmatpush1.msra.mxu0 0.0
      %345 = vmatprep.subr.mxu0 0.0
      %346 = vmatpush1.msra.mxu0 0.0
      %347 = vmatprep.subr.mxu0 0.0
      %348 = vmatpush1.msra.mxu0 0.0
      %349 = vmatprep.subr.mxu0 0.0
      %350 = vmatpush1.msra.mxu0 0.0
      %351 = vmatprep.subr.mxu0 0.0
      %352 = vmatpush1.msra.mxu0 0.0
      %353 = vmatprep.subr.mxu0 0.0
      %354 = vmatpush1.msra.mxu0 0.0
      %355 = vmatprep.subr.mxu0 0.0
      %356 = vmatpush1.msra.mxu0 0.0
      %357 = vmatprep.subr.mxu0 0.0
      %358 = vmatpush1.msra.mxu0 0.0
      %359 = vmatprep.subr.mxu0 0.0
      %360 = vmatpush1.msra.mxu0 0.0
      %361 = vmatprep.subr.mxu0 0.0
      %362 = vmatpush1.msra.mxu0 0.0
      %363 = vmatprep.subr.mxu0 0.0
      %364 = vmatpush1.msra.mxu0 0.0
      %365 = vmatprep.subr.mxu0 0.0
      %366 = vmatpush1.msra.mxu0 0.0
      %367 = vmatprep.subr.mxu0 0.0
      %368 = vmatpush1.msra.mxu0 0.0
      %369 = vmatprep.subr.mxu0 0.0
      %370 = vmatpush1.msra.mxu0 0.0
      %371 = vmatprep.subr.mxu0 0.0
      %372 = vmatpush1.msra.mxu0 0.0
      %373 = vmatprep.subr.mxu0 0.0
      %374 = vmatpush1.msra.mxu0 0.0
      %375 = vmatprep.mubr.f32.mxu0 0.0
      %376 = vmatmul.mubr.f32.gmra.mrb[0].mxu0 %v303
      %v377 = vpop.f32.mrb[0].mxu0
      %v378 = vadd.f32 %v299, %v377
      %v379 = vpop.f32.mrb[0].mxu0
      %380 = vmatprep.mubr.f32.mxu0 0.0
      %381 = vmatmul.mubr.f32.gmra.mrb[0].mxu0 %v306
      %v382 = vpop.f32.mrb[0].mxu0
      %v383 = vadd.f32 %v299, %v382
      %v384 = vpop.f32.mrb[0].mxu0
      %385 = vmatprep.mubr.f32.mxu0 0.0
      %386 = vmatmul.mubr.f32.gmra.mrb[0].mxu0 %v309
      %v387 = vpop.f32.mrb[0].mxu0
      %v388 = vadd.f32 %v299, %v387
      %v389 = vpop.f32.mrb[0].mxu0
      %390 = vdwg.mxu0
      %vm391 = vcmask 523264
      %392 = vst.msk [vmem:[#allocation2] sm:$0xff] %vm391, %v378
      %393 = vst.msk [vmem:[#allocation2 + $0x8] sm:$0xff] %vm391, %v383
      %394 = vst.msk [vmem:[#allocation2 + $0x10] sm:$0xff] %vm391, %v388
      %vm395 = vcmask 122880
      %396 = vst.msk [vmem:[#allocation3] sm:$0x1] %vm395, 0.0
      %397 = vst.msk [vmem:[#allocation4] sm:$0x1] %vm395, 0.0
      %v398 = vld [vmem:[%s3] sm:$0xff]
      %v399 = vld [vmem:[%s3 + $0x8] sm:$0xff]
      loop: start=0, step=1, limit=24
      $region49: #{bidaf_output.2} parent=47 // loop_pre_header
        _
      $region50: #{bidaf_output.2} parent=47 // loop_header
        %s401 = sphi 0, %s405
        %p402 = scmp.ge.s32.totalorder %s401, 24
      $region51: #{bidaf_output.2} parent=47 // loop_header_branch
        %404 = sbr.rel (%p402) target = $region55
      $region52: #{bidaf_output.2} parent=47 // loop_body
        %s406 = scalar_lea.vmem [#allocation2], %s401
        %v407 = vld [vmem:[%s406] sm:$0x1]
        %v408 = vld [vmem:[#allocation3] sm:$0x1]
        %vm409 = vcmask 130048
        %v411 = vsel %vm409, %v408, 0
        %413 = vmatprep.subr.mxu0 0.0
        %414 = vmatpush1.msra.mxu0 %v398
        %415 = vmatprep.subr.mxu0 0.0
        %416 = vmatpush1.msra.mxu0 %v399
        %417 = vmatprep.subr.mxu0 0.0
        %418 = vmatpush1.msra.mxu0 0.0
        %419 = vmatprep.subr.mxu0 0.0
        %420 = vmatpush1.msra.mxu0 0.0
        %421 = vmatprep.subr.mxu0 0.0
        %422 = vmatpush1.msra.mxu0 0.0
        %423 = vmatprep.subr.mxu0 0.0
        %424 = vmatpush1.msra.mxu0 0.0
        %425 = vmatprep.subr.mxu0 0.0
        %426 = vmatpush1.msra.mxu0 0.0
        %427 = vmatprep.subr.mxu0 0.0
        %428 = vmatpush1.msra.mxu0 0.0
        %429 = vmatprep.subr.mxu0 0.0
        %430 = vmatpush1.msra.mxu0 0.0
        %431 = vmatprep.subr.mxu0 0.0
        %432 = vmatpush1.msra.mxu0 0.0
        %433 = vmatprep.subr.mxu0 0.0
        %434 = vmatpush1.msra.mxu0 0.0
        %435 = vmatprep.subr.mxu0 0.0
        %436 = vmatpush1.msra.mxu0 0.0
        %437 = vmatprep.subr.mxu0 0.0
        %438 = vmatpush1.msra.mxu0 0.0
        %439 = vmatprep.subr.mxu0 0.0
        %440 = vmatpush1.msra.mxu0 0.0
        %441 = vmatprep.subr.mxu0 0.0
        %442 = vmatpush1.msra.mxu0 0.0
        %443 = vmatprep.subr.mxu0 0.0
        %444 = vmatpush1.msra.mxu0 0.0
        %445 = vmatprep.subr.mxu0 0.0
        %446 = vmatpush1.msra.mxu0 0.0
        %447 = vmatprep.subr.mxu0 0.0
        %448 = vmatpush1.msra.mxu0 0.0
        %449 = vmatprep.subr.mxu0 0.0
        %450 = vmatpush1.msra.mxu0 0.0
        %451 = vmatprep.subr.mxu0 0.0
        %452 = vmatpush1.msra.mxu0 0.0
        %453 = vmatprep.subr.mxu0 0.0
        %454 = vmatpush1.msra.mxu0 0.0
        %455 = vmatprep.subr.mxu0 0.0
        %456 = vmatpush1.msra.mxu0 0.0
        %457 = vmatprep.subr.mxu0 0.0
        %458 = vmatpush1.msra.mxu0 0.0
        %459 = vmatprep.subr.mxu0 0.0
        %460 = vmatpush1.msra.mxu0 0.0
        %461 = vmatprep.subr.mxu0 0.0
        %462 = vmatpush1.msra.mxu0 0.0
        %463 = vmatprep.subr.mxu0 0.0
        %464 = vmatpush1.msra.mxu0 0.0
        %465 = vmatprep.subr.mxu0 0.0
        %466 = vmatpush1.msra.mxu0 0.0
        %467 = vmatprep.subr.mxu0 0.0
        %468 = vmatpush1.msra.mxu0 0.0
        %469 = vmatprep.subr.mxu0 0.0
        %470 = vmatpush1.msra.mxu0 0.0
        %471 = vmatprep.subr.mxu0 0.0
        %472 = vmatpush1.msra.mxu0 0.0
        %473 = vmatprep.subr.mxu0 0.0
        %474 = vmatpush1.msra.mxu0 0.0
        %475 = vmatprep.subr.mxu0 0.0
        %476 = vmatpush1.msra.mxu0 0.0
        %477 = vmatprep.mubr.f32.mxu0 0.0
        %478 = vmatmul.mubr.f32.gmra.mrb[0].mxu0 %v411
        %v479 = vpop.f32.mrb[0].mxu0
        %v480 = vadd.f32 0.0, %v479
        %v481 = vpop.f32.mrb[0].mxu0
        %482 = vdwg.mxu0
        %v483 = vadd.f32 %v407, %v480
        %v484 = vsub.f32 0.0, %v483
        %v485 = vmul.f32 %v484, 1.442695
        %v486 = vpow.pop %v485
        %v487 = vadd.f32 %v486, 1.0
        %v488 = vrcp.pop %v487
        %v489 = vmul.f32 1.0, %v488
        %v490 = vtanh.pop %v483
        %v491 = vld [vmem:[#allocation4] sm:$0x1]
        %v493 = vlaneseq
        %v494 = vshrl.u32 %v493, 7
        %v495 = vsub.s32 0, %v494
        %v496 = vrot.slane %v491, %v495
        %497 = vrot.lane.b32.xlu0 %v496, 16
        %v498 = vpop.permute.xlu0 %497
        %v500 = vmul.f32 %v489, %v498
        %502 = vrot.lane.b32.xlu0 %v490, 96
        %v503 = vpop.permute.xlu0 %502
        %v505 = vmul.f32 %v489, %v503
        %507 = vrot.lane.b32.xlu0 %v505, 16
        %v508 = vpop.permute.xlu0 %507
        %v510 = vadd.f32 %v500, %v508
        %v511 = vtanh.pop %v510
        %513 = vrot.lane.b32.xlu0 %v511, 32
        %v514 = vpop.permute.xlu0 %513
        %v516 = vmul.f32 %v489, %v514
        %p517 = scmp.lt.s32.totalorder %s401, %s286
        %s518 = scalar_select %p517, 1, 0
        %s519 = scvt.s32.f32 %s518
        %v520 = vstv %s519
        %v521 = vmul.f32 %v520, %v516
        %s522 = ssub.f32 1.0, %s519
        %v523 = vstv %s522
        %v524 = vmul.f32 %v523, %v408
        %v526 = vlaneseq
        %v527 = vshrl.u32 %v526, 7
        %v528 = vsub.s32 0, %v527
        %v529 = vrot.slane %v524, %v528
        %530 = vrot.lane.b32.xlu0 %v529, 48
        %v531 = vpop.permute.xlu0 %530
        %v533 = vadd.f32 %v521, %v531
        %v534 = vmul.f32 %v520, %v510
        %v535 = vmul.f32 %v523, %v491
        %v537 = vlaneseq
        %v538 = vshrl.u32 %v537, 7
        %v539 = vsub.s32 0, %v538
        %v540 = vrot.slane %v535, %v539
        %541 = vrot.lane.b32.xlu0 %v540, 16
        %v542 = vpop.permute.xlu0 %541
        %v544 = vadd.f32 %v534, %v542
        %546 = vrot.lane.b32.xlu0 %v533, 80
        %v547 = vpop.permute.xlu0 %546
        %549 = vst.msk [vmem:[#allocation3] sm:$0x1] %vm395, %v547
        %551 = vrot.lane.b32.xlu0 %v544, 112
        %v552 = vpop.permute.xlu0 %551
        %554 = vst.msk [vmem:[#allocation4] sm:$0x1] %vm395, %v552
        %v555 = vmul.f32 %v520, %v533
        %557 = vrot.lane.b32.xlu0 %v555, 80
        %v558 = vpop.permute.xlu0 %557
        %s560 = scalar_lea.vmem %s285, %s401
        %561 = vst.msk [vmem:[%s560] sm:$0x1] %vm395, %v558
      $region53: #{bidaf_output.2} parent=47 // loop_footer
        %s405 = sadd.s32 1, %s401
      $region54: #{bidaf_output.2} parent=47 // loop_footer_branch
        %400 = sbr.rel target = $region50
      $region55: #{bidaf_output.2} parent=47 // loop_exit
        _
      %v562 = vld [vmem:[%s5] sm:$0xff]
      %v563 = vld [vmem:[%s5 + $0x8] sm:$0xff]
      %v564 = vld [vmem:[%s5 + $0x10] sm:$0xff]
      %v565 = vld [vmem:[%s5 + $0x18] sm:$0xff]
      %v566 = vld [vmem:[%s7] sm:$0x1]
      %v568 = vlaneseq
      %v569 = vshrl.u32 %v568, 7
      %v570 = vsub.s32 0, %v569
      %v571 = vrot.slane %v566, %v570
      %573 = vmatprep.subr.mxu0 0.0
      %574 = vmatpush1.msra.mxu0 %v562
      %575 = vmatprep.subr.mxu0 0.0
      %576 = vmatpush1.msra.mxu0 %v563
      %577 = vmatprep.subr.mxu0 0.0
      %578 = vmatpush1.msra.mxu0 %v564
      %579 = vmatprep.subr.mxu0 0.0
      %580 = vmatpush1.msra.mxu0 %v565
      %581 = vmatprep.subr.mxu0 0.0
      %582 = vmatpush1.msra.mxu0 0.0
      %583 = vmatprep.subr.mxu0 0.0
      %584 = vmatpush1.msra.mxu0 0.0
      %585 = vmatprep.subr.mxu0 0.0
      %586 = vmatpush1.msra.mxu0 0.0
      %587 = vmatprep.subr.mxu0 0.0
      %588 = vmatpush1.msra.mxu0 0.0
      %589 = vmatprep.subr.mxu0 0.0
      %590 = vmatpush1.msra.mxu0 0.0
      %591 = vmatprep.subr.mxu0 0.0
      %592 = vmatpush1.msra.mxu0 0.0
      %593 = vmatprep.subr.mxu0 0.0
      %594 = vmatpush1.msra.mxu0 0.0
      %595 = vmatprep.subr.mxu0 0.0
      %596 = vmatpush1.msra.mxu0 0.0
      %597 = vmatprep.subr.mxu0 0.0
      %598 = vmatpush1.msra.mxu0 0.0
      %599 = vmatprep.subr.mxu0 0.0
      %600 = vmatpush1.msra.mxu0 0.0
      %601 = vmatprep.subr.mxu0 0.0
      %602 = vmatpush1.msra.mxu0 0.0
      %603 = vmatprep.subr.mxu0 0.0
      %604 = vmatpush1.msra.mxu0 0.0
      %605 = vmatprep.subr.mxu0 0.0
      %606 = vmatpush1.msra.mxu0 0.0
      %607 = vmatprep.subr.mxu0 0.0
      %608 = vmatpush1.msra.mxu0 0.0
      %609 = vmatprep.subr.mxu0 0.0
      %610 = vmatpush1.msra.mxu0 0.0
      %611 = vmatprep.subr.mxu0 0.0
      %612 = vmatpush1.msra.mxu0 0.0
      %613 = vmatprep.subr.mxu0 0.0
      %614 = vmatpush1.msra.mxu0 0.0
      %615 = vmatprep.subr.mxu0 0.0
      %616 = vmatpush1.msra.mxu0 0.0
      %617 = vmatprep.subr.mxu0 0.0
      %618 = vmatpush1.msra.mxu0 0.0
      %619 = vmatprep.subr.mxu0 0.0
      %620 = vmatpush1.msra.mxu0 0.0
      %621 = vmatprep.subr.mxu0 0.0
      %622 = vmatpush1.msra.mxu0 0.0
      %623 = vmatprep.subr.mxu0 0.0
      %624 = vmatpush1.msra.mxu0 0.0
      %625 = vmatprep.subr.mxu0 0.0
      %626 = vmatpush1.msra.mxu0 0.0
      %627 = vmatprep.subr.mxu0 0.0
      %628 = vmatpush1.msra.mxu0 0.0
      %629 = vmatprep.subr.mxu0 0.0
      %630 = vmatpush1.msra.mxu0 0.0
      %631 = vmatprep.subr.mxu0 0.0
      %632 = vmatpush1.msra.mxu0 0.0
      %633 = vmatprep.subr.mxu0 0.0
      %634 = vmatpush1.msra.mxu0 0.0
      %635 = vmatprep.subr.mxu0 0.0
      %636 = vmatpush1.msra.mxu0 0.0
      %637 = vmatprep.mubr.f32.mxu0 0.0
      %638 = vmatmul.mubr.f32.gmra.mrb[0].mxu0 %v303
      %v639 = vpop.f32.mrb[0].mxu0
      %v640 = vadd.f32 %v571, %v639
      %v641 = vpop.f32.mrb[0].mxu0
      %642 = vmatprep.mubr.f32.mxu0 0.0
      %643 = vmatmul.mubr.f32.gmra.mrb[0].mxu0 %v306
      %v644 = vpop.f32.mrb[0].mxu0
      %v645 = vadd.f32 %v571, %v644
      %v646 = vpop.f32.mrb[0].mxu0
      %647 = vmatprep.mubr.f32.mxu0 0.0
      %648 = vmatmul.mubr.f32.gmra.mrb[0].mxu0 %v309
      %v649 = vpop.f32.mrb[0].mxu0
      %v650 = vadd.f32 %v571, %v649
      %v651 = vpop.f32.mrb[0].mxu0
      %652 = vdwg.mxu0
      %653 = vst.msk [vmem:[#allocation2] sm:$0xff] %vm391, %v640
      %654 = vst.msk [vmem:[#allocation2 + $0x8] sm:$0xff] %vm391, %v645
      %655 = vst.msk [vmem:[#allocation2 + $0x10] sm:$0xff] %vm391, %v650
      %656 = vst.msk [vmem:[#allocation3] sm:$0x1] %vm395, 0.0
      %657 = vst.msk [vmem:[#allocation4] sm:$0x1] %vm395, 0.0
      %v658 = vld [vmem:[%s6] sm:$0xff]
      %v659 = vld [vmem:[%s6 + $0x8] sm:$0xff]
      loop: start=0, step=1, limit=24
      $region56: #{bidaf_output.2} parent=47 // loop_pre_header
        _
      $region57: #{bidaf_output.2} parent=47 // loop_header
        %s661 = sphi 0, %s665
        %p662 = scmp.ge.s32.totalorder %s661, 24
      $region58: #{bidaf_output.2} parent=47 // loop_header_branch
        %664 = sbr.rel (%p662) target = $region62
      $region59: #{bidaf_output.2} parent=47 // loop_body
        %s666 = ssub.s32 23, %s661
        %s667 = scalar_lea.vmem [#allocation2], %s666
        %v668 = vld [vmem:[%s667] sm:$0x1]
        %v669 = vld [vmem:[#allocation3] sm:$0x1]
        %vm670 = vcmask 130048
        %v672 = vsel %vm670, %v669, 0
        %674 = vmatprep.subr.mxu0 0.0
        %675 = vmatpush1.msra.mxu0 %v658
        %676 = vmatprep.subr.mxu0 0.0
        %677 = vmatpush1.msra.mxu0 %v659
        %678 = vmatprep.subr.mxu0 0.0
        %679 = vmatpush1.msra.mxu0 0.0
        %680 = vmatprep.subr.mxu0 0.0
        %681 = vmatpush1.msra.mxu0 0.0
        %682 = vmatprep.subr.mxu0 0.0
        %683 = vmatpush1.msra.mxu0 0.0
        %684 = vmatprep.subr.mxu0 0.0
        %685 = vmatpush1.msra.mxu0 0.0
        %686 = vmatprep.subr.mxu0 0.0
        %687 = vmatpush1.msra.mxu0 0.0
        %688 = vmatprep.subr.mxu0 0.0
        %689 = vmatpush1.msra.mxu0 0.0
        %690 = vmatprep.subr.mxu0 0.0
        %691 = vmatpush1.msra.mxu0 0.0
        %692 = vmatprep.subr.mxu0 0.0
        %693 = vmatpush1.msra.mxu0 0.0
        %694 = vmatprep.subr.mxu0 0.0
        %695 = vmatpush1.msra.mxu0 0.0
        %696 = vmatprep.subr.mxu0 0.0
        %697 = vmatpush1.msra.mxu0 0.0
        %698 = vmatprep.subr.mxu0 0.0
        %699 = vmatpush1.msra.mxu0 0.0
        %700 = vmatprep.subr.mxu0 0.0
        %701 = vmatpush1.msra.mxu0 0.0
        %702 = vmatprep.subr.mxu0 0.0
        %703 = vmatpush1.msra.mxu0 0.0
        %704 = vmatprep.subr.mxu0 0.0
        %705 = vmatpush1.msra.mxu0 0.0
        %706 = vmatprep.subr.mxu0 0.0
        %707 = vmatpush1.msra.mxu0 0.0
        %708 = vmatprep.subr.mxu0 0.0
        %709 = vmatpush1.msra.mxu0 0.0
        %710 = vmatprep.subr.mxu0 0.0
        %711 = vmatpush1.msra.mxu0 0.0
        %712 = vmatprep.subr.mxu0 0.0
        %713 = vmatpush1.msra.mxu0 0.0
        %714 = vmatprep.subr.mxu0 0.0
        %715 = vmatpush1.msra.mxu0 0.0
        %716 = vmatprep.subr.mxu0 0.0
        %717 = vmatpush1.msra.mxu0 0.0
        %718 = vmatprep.subr.mxu0 0.0
        %719 = vmatpush1.msra.mxu0 0.0
        %720 = vmatprep.subr.mxu0 0.0
        %721 = vmatpush1.msra.mxu0 0.0
        %722 = vmatprep.subr.mxu0 0.0
        %723 = vmatpush1.msra.mxu0 0.0
        %724 = vmatprep.subr.mxu0 0.0
        %725 = vmatpush1.msra.mxu0 0.0
        %726 = vmatprep.subr.mxu0 0.0
        %727 = vmatpush1.msra.mxu0 0.0
        %728 = vmatprep.subr.mxu0 0.0
        %729 = vmatpush1.msra.mxu0 0.0
        %730 = vmatprep.subr.mxu0 0.0
        %731 = vmatpush1.msra.mxu0 0.0
        %732 = vmatprep.subr.mxu0 0.0
        %733 = vmatpush1.msra.mxu0 0.0
        %734 = vmatprep.subr.mxu0 0.0
        %735 = vmatpush1.msra.mxu0 0.0
        %736 = vmatprep.subr.mxu0 0.0
        %737 = vmatpush1.msra.mxu0 0.0
        %738 = vmatprep.mubr.f32.mxu0 0.0
        %739 = vmatmul.mubr.f32.gmra.mrb[0].mxu0 %v672
        %v740 = vpop.f32.mrb[0].mxu0
        %v741 = vadd.f32 0.0, %v740
        %v742 = vpop.f32.mrb[0].mxu0
        %743 = vdwg.mxu0
        %v744 = vadd.f32 %v668, %v741
        %v745 = vsub.f32 0.0, %v744
        %v746 = vmul.f32 %v745, 1.442695
        %v747 = vpow.pop %v746
        %v748 = vadd.f32 %v747, 1.0
        %v749 = vrcp.pop %v748
        %v750 = vmul.f32 1.0, %v749
        %v751 = vtanh.pop %v744
        %v752 = vld [vmem:[#allocation4] sm:$0x1]
        %v754 = vlaneseq
        %v755 = vshrl.u32 %v754, 7
        %v756 = vsub.s32 0, %v755
        %v757 = vrot.slane %v752, %v756
        %758 = vrot.lane.b32.xlu0 %v757, 16
        %v759 = vpop.permute.xlu0 %758
        %v761 = vmul.f32 %v750, %v759
        %763 = vrot.lane.b32.xlu0 %v751, 96
        %v764 = vpop.permute.xlu0 %763
        %v766 = vmul.f32 %v750, %v764
        %768 = vrot.lane.b32.xlu0 %v766, 16
        %v769 = vpop.permute.xlu0 %768
        %v771 = vadd.f32 %v761, %v769
        %v772 = vtanh.pop %v771
        %774 = vrot.lane.b32.xlu0 %v772, 32
        %v775 = vpop.permute.xlu0 %774
        %v777 = vmul.f32 %v750, %v775
        %p778 = scmp.lt.s32.totalorder %s666, %s286
        %s779 = scalar_select %p778, 1, 0
        %s780 = scvt.s32.f32 %s779
        %v781 = vstv %s780
        %v782 = vmul.f32 %v781, %v777
        %s783 = ssub.f32 1.0, %s780
        %v784 = vstv %s783
        %v785 = vmul.f32 %v784, %v669
        %v787 = vlaneseq
        %v788 = vshrl.u32 %v787, 7
        %v789 = vsub.s32 0, %v788
        %v790 = vrot.slane %v785, %v789
        %791 = vrot.lane.b32.xlu0 %v790, 48
        %v792 = vpop.permute.xlu0 %791
        %v794 = vadd.f32 %v782, %v792
        %v795 = vmul.f32 %v781, %v771
        %v796 = vmul.f32 %v784, %v752
        %v798 = vlaneseq
        %v799 = vshrl.u32 %v798, 7
        %v800 = vsub.s32 0, %v799
        %v801 = vrot.slane %v796, %v800
        %802 = vrot.lane.b32.xlu0 %v801, 16
        %v803 = vpop.permute.xlu0 %802
        %v805 = vadd.f32 %v795, %v803
        %807 = vrot.lane.b32.xlu0 %v794, 80
        %v808 = vpop.permute.xlu0 %807
        %810 = vst.msk [vmem:[#allocation3] sm:$0x1] %vm395, %v808
        %812 = vrot.lane.b32.xlu0 %v805, 112
        %v813 = vpop.permute.xlu0 %812
        %815 = vst.msk [vmem:[#allocation4] sm:$0x1] %vm395, %v813
        %v816 = vmul.f32 %v781, %v794
        %818 = vrot.lane.b32.xlu0 %v816, 96
        %v819 = vpop.permute.xlu0 %818
        %s821 = scalar_lea.vmem %s285, %s666
        %vm822 = vcmask 254080
        %823 = vst.msk [vmem:[%s821] sm:$0x1] %vm822, %v819
      $region60: #{bidaf_output.2} parent=47 // loop_footer
        %s665 = sadd.s32 1, %s661
      $region61: #{bidaf_output.2} parent=47 // loop_footer_branch
        %660 = sbr.rel target = $region57
      $region62: #{bidaf_output.2} parent=47 // loop_exit
        _
      %p824 = scmp.lt.s32.totalorder %s25, 1
      %s825 = scalar_select %p824, %s25, 1
      %s826 = smul.addr %s825, 3
      %s827 = smul.addr %s826, 8
      %s828 = scalar_lea.vmem %s8, %s827
      // Predicated region
      $region63: #{bidaf_output.2} parent=47 // pred_check
        %p829 = pneg %p195
      $region64: #{bidaf_output.2} parent=47 // pred_check_branch
        %831 = sbr.rel (%p829) target = $region66
      $region65: #{bidaf_output.2} parent=47 // pred_region
        _
      $region66: #{bidaf_output.2} parent=47 // pred_fallthru
        _
    $region48: #{bidaf_output.2} parent=5 // pred_fallthru
      _
    %p832 = scmp.le.s32.totalorder 2, %s20
    // Predicated region
    $region67: #{bidaf_output.2} parent=5 // pred_check
      %p833 = pneg %p832
    $region68: #{bidaf_output.2} parent=5 // pred_check_branch
      %835 = sbr.rel (%p833) target = $region70
    $region69: #{bidaf_output.2} parent=5 // pred_region
      %s836 = ssub.s32 %s20, 2
      // Predicated region
      $region71: #{bidaf_output.2} parent=69 // pred_check
        %p837 = pneg %p201
      $region72: #{bidaf_output.2} parent=69 // pred_check_branch
        %839 = sbr.rel (%p837) target = $region74
      $region73: #{bidaf_output.2} parent=69 // pred_region
        %p840 = scmp.lt.s32.totalorder %s26, 1
        %s841 = scalar_select %p840, %s26, 1
        %s842 = smul.addr %s841, 3
        %s843 = smul.addr %s842, 8
        %s844 = scalar_lea.vmem %s8, %s843
      $region74: #{bidaf_output.2} parent=69 // pred_fallthru
        _
    $region70: #{bidaf_output.2} parent=5 // pred_fallthru
      _
  $region6: #{bidaf_output.2} parent=0 // loop_footer
    %s24 = sadd.s32 1, %s20
  $region7: #{bidaf_output.2} parent=0 // loop_footer_branch
    %19 = sbr.rel target = $region3
  $region8: #{bidaf_output.2} parent=0 // loop_exit
    _

</llo_original>
